<compile_context>
chip_gen: v6e
topology: v6e:2x2x1
jax: 0.10.0
libtpu: 0.0.40
codegen_flags: <defaults>
</compile_context>

<pallas_src>
import functools
import math

import jax
import jax.numpy as jnp
from jax.experimental import pallas as pl
from jax.experimental.pallas import tpu as pltpu


VMEM_LIMIT_BYTES = 32 * 1024 * 1024   # explicit scoped-VMEM budget (review item)
TM_MAX = 1024                         # max M tile for the im2col matmul path


def _round_up(x, m):
    return ((x + m - 1) // m) * m


# ---------------------------------------------------------------------------
# Kernel 1: fused NHWC conv (stride 1) -- im2col never materialized in HBM.
#   x_ref : (Hp, Wp, Cin)      bf16  (one pre-padded image, batch dim squeezed)
#   w_ref : (kh*kw, Cin, Cout) bf16  (resident across the whole grid)
#   b_ref : (1, Cout)          f32
#   o_ref : (Ho, Wo, Cout)     bf16
# Per output row r: accumulate kh*kw matmuls (Wo,Cin)x(Cin,Cout) in f32 on the MXU,
# add bias, optional ReLU, store bf16.
# ---------------------------------------------------------------------------
def _fused_conv_kernel(x_ref, w_ref, b_ref, o_ref, *, kh, kw, apply_relu):
    Ho, Wo, cout = o_ref.shape
    bias = b_ref[...]                                      # (1, Cout) f32, hoisted

    def row_body(r, carry):
        acc = jnp.zeros((Wo, cout), jnp.float32)
        for i in range(kh):
            for j in range(kw):
                tap = x_ref[r + i, pl.ds(j, Wo), :]        # (Wo, Cin) bf16
                acc = acc + jnp.dot(tap, w_ref[i * kw + j],
                                    preferred_element_type=jnp.float32)
        out = acc + bias                                   # (Wo, Cout) f32
        if apply_relu:
            out = jnp.maximum(out, 0.0)
        o_ref[r] = out.astype(o_ref.dtype)
        return carry

    jax.lax.fori_loop(0, Ho, row_body, 0)


def conv2d_fused_pallas(x, w, b, *, padding, relu):
    """Fused stride-1 conv: x (B,H,W,Cin) NHWC, w (kh,kw,Cin,Cout), b (Cout,)."""
    B, H, W, cin = x.shape
    kh, kw, cin2, cout = w.shape
    assert cin2 == cin
    xb = x.astype(jnp.bfloat16)                            # bf16 activations in HBM
    if padding:
        xb = jnp.pad(xb, ((0, 0), (padding, padding), (padding, padding), (0, 0)))
    Hp, Wp = H + 2 * padding, W + 2 * padding
    Ho, Wo = Hp - kh + 1, Wp - kw + 1
    wb = w.reshape(kh * kw, cin, cout).astype(jnp.bfloat16)
    b2 = b.reshape(1, cout).astype(jnp.float32)

    kernel = functools.partial(_fused_conv_kernel, kh=kh, kw=kw, apply_relu=relu)
    # TODO(synk): for very large images / B=1 add output-row-band tiling (halo DMA)
    # instead of one whole image per grid step.
    return pl.pallas_call(
        kernel,
        out_shape=jax.ShapeDtypeStruct((B, Ho, Wo, cout), jnp.bfloat16),
        grid_spec=pltpu.PrefetchScalarGridSpec(
            num_scalar_prefetch=0,
            grid=(B,),
            in_specs=[
                pl.BlockSpec((None, Hp, Wp, cin), lambda bb: (bb, 0, 0, 0)),
                pl.BlockSpec((kh * kw, cin, cout), lambda bb: (0, 0, 0)),
                pl.BlockSpec((1, cout), lambda bb: (0, 0)),
            ],
            out_specs=pl.BlockSpec((None, Ho, Wo, cout), lambda bb: (bb, 0, 0, 0)),
        ),
        compiler_params=pltpu.CompilerParams(
            dimension_semantics=("parallel",),             # batch -> v7x megacore
            vmem_limit_bytes=VMEM_LIMIT_BYTES,
        ),
    )(xb, wb, b2)


# ---------------------------------------------------------------------------
# Kernel 2: one-shot matmul tile with fused bias + optional ReLU (K, N resident).
# Used for the stride-2 conv2 layer on bf16 im2col patches.
# ---------------------------------------------------------------------------
def _matmul_bias_act_kernel(x_ref, w_ref, b_ref, o_ref, *, apply_relu):
    acc = jnp.dot(x_ref[...], w_ref[...], preferred_element_type=jnp.float32)
    out = acc + b_ref[...]                                 # (tm, N) + (1, N)
    if apply_relu:
        out = jnp.maximum(out, 0.0)
    o_ref[...] = out.astype(o_ref.dtype)


def _pick_tm(M, tm_max):
    """M tile: divides M exactly when possible (no pad copy), 128/16-aligned,
    and >=2 grid steps for large M (v7x megacore)."""
    if M <= tm_max:
        if M >= 512 and (M // 2) % 128 == 0:
            return M // 2, M                               # two grid steps
        return M, M                                        # single full-dim block
    for align in (128, 16, 8):
        if M % align:
            continue
        t = (tm_max // align) * align
        while t >= align:
            if M % t == 0:
                return t, M
            t -= align
    return tm_max, _round_up(M, tm_max)                    # rare ragged fallback


def pallas_matmul_bias(x, w, b, *, relu, tm_max=TM_MAX):
    """out = relu?(x @ w + b); x (M,K), w (K,N), b (N,) -> bf16 (M,N)."""
    M, K = x.shape
    K2, N = w.shape
    assert K == K2
    xb = x.astype(jnp.bfloat16)                            # no-op if already bf16
    wb = w.astype(jnp.bfloat16)
    b2 = b.reshape(1, N).astype(jnp.float32)

    tm, Mp = _pick_tm(M, tm_max)
    if Mp != M:
        xb = jnp.pad(xb, ((0, Mp - M), (0, 0)))

    kernel = functools.partial(_matmul_bias_act_kernel, apply_relu=relu)
    out = pl.pallas_call(
        kernel,
        out_shape=jax.ShapeDtypeStruct((Mp, N), jnp.bfloat16),
        grid_spec=pltpu.PrefetchScalarGridSpec(
            num_scalar_prefetch=0,
            grid=(Mp // tm,),
            in_specs=[
                pl.BlockSpec((tm, K), lambda i: (i, 0)),   # activation tile
                pl.BlockSpec((K, N), lambda i: (0, 0)),    # resident weight slab
                pl.BlockSpec((1, N), lambda i: (0, 0)),    # resident bias row
            ],
            out_specs=pl.BlockSpec((tm, N), lambda i: (i, 0)),
        ),
        compiler_params=pltpu.CompilerParams(
            dimension_semantics=("parallel",),
            vmem_limit_bytes=VMEM_LIMIT_BYTES,
        ),
    )(xb, wb, b2)

    if Mp != M:
        out = out[:M]
    return out


def conv2d_im2col_pallas(x, w, b, *, stride, padding, relu):
    """im2col (built directly in bf16) + Pallas matmul.  Used for stride-2 conv2."""
    B, H, W, cin = x.shape
    kh, kw, cin2, cout = w.shape
    assert cin2 == cin
    xb = x.astype(jnp.bfloat16)                            # bf16 BEFORE pad/slice/concat
    if padding:
        xb = jnp.pad(xb, ((0, 0), (padding, padding), (padding, padding), (0, 0)))
    Hp, Wp = H + 2 * padding, W + 2 * padding
    Ho = (Hp - kh) // stride + 1
    Wo = (Wp - kw) // stride + 1

    if kh == 1 and kw == 1 and stride == 1:
        patches = xb
    else:
        cols = []
        for i in range(kh):
            for j in range(kw):
                cols.append(
                    xb[:, i: i + (Ho - 1) * stride + 1: stride,
                          j: j + (Wo - 1) * stride + 1: stride, :]
                )
        patches = jnp.concatenate(cols, axis=-1)           # (B, Ho, Wo, kh*kw*Cin) bf16

    X = patches.reshape(B * Ho * Wo, kh * kw * cin)
    W2 = w.reshape(kh * kw * cin, cout).astype(jnp.bfloat16)
    out = pallas_matmul_bias(X, W2, b, relu=relu)
    return out.reshape(B, Ho, Wo, cout)


def conv2d_xla(x, w, b, *, stride, padding, relu):
    """XLA path: conv1 (Cin=3), PSP 1x1 branches, 3-channel cls head."""
    out = jax.lax.conv_general_dilated(
        x.astype(jnp.bfloat16), w.astype(jnp.bfloat16),
        window_strides=(stride, stride),
        padding=((padding, padding), (padding, padding)),
        dimension_numbers=("NHWC", "HWIO", "NHWC"),
        preferred_element_type=jnp.float32,
    ) + b.astype(jnp.float32)
    if relu:
        return jnp.maximum(out, 0.0).astype(jnp.bfloat16)
    return out                                             # f32 logits (cls head)


def conv2d(x, w, b, *, stride=1, padding=1, relu=True):
    """Dispatch: fused Pallas conv / Pallas im2col matmul / XLA."""
    B, H, W, cin = x.shape
    kh, kw, _, cout = w.shape
    Ho = (H + 2 * padding - kh) // stride + 1
    Wo = (W + 2 * padding - kw) // stride + 1
    M = B * Ho * Wo

    if stride == 1 and cin >= 16 and cout >= 16:
        return conv2d_fused_pallas(x, w, b, padding=padding, relu=relu)
    if cin >= 8 and cout >= 16 and M >= 128:
        return conv2d_im2col_pallas(x, w, b, stride=stride, padding=padding, relu=relu)
    # Tiny PSP branches (Cout=8), cls head (Cout=3), conv1 (Cin=3 -> K=27): XLA.
    return conv2d_xla(x, w, b, stride=stride, padding=padding, relu=relu)


# ---------------------------------------------------------------------------
# Pooling / resize glue (XLA)
# ---------------------------------------------------------------------------
def adaptive_avg_pool2d(x, bins):
    """PyTorch AdaptiveAvgPool2d semantics; x (B,H,W,C) -> (B,bins,bins,C) f32."""
    B, H, W, C = x.shape
    rows = []
    for i in range(bins):
        hs, he = (i * H) // bins, math.ceil((i + 1) * H / bins)
        cols = []
        for j in range(bins):
            ws, we = (j * W) // bins, math.ceil((j + 1) * W / bins)
            cols.append(jnp.mean(x[:, hs:he, ws:we, :].astype(jnp.float32), axis=(1, 2)))
        rows.append(jnp.stack(cols, axis=1))
    return jnp.stack(rows, axis=1)


def bilinear_resize(x, Ho, Wo):
    B, H, W, C = x.shape
    return jax.image.resize(x, (B, Ho, Wo, C), method="bilinear")


# ---------------------------------------------------------------------------
# Parameter init (deterministic, PyTorch-conv-style uniform fan-in)
# ---------------------------------------------------------------------------
def init_conv(key, kh, kw, cin, cout):
    kw_key, kb_key = jax.random.split(key)
    scale = 1.0 / math.sqrt(kh * kw * cin)
    w = jax.random.uniform(kw_key, (kh, kw, cin, cout), jnp.float32, -scale, scale)
    b = jax.random.uniform(kb_key, (cout,), jnp.float32, -scale, scale)
    return w, b


def init_params(seed=0):
    keys = jax.random.split(jax.random.PRNGKey(seed), 10)
    return {
        "conv1": init_conv(keys[0], 3, 3, 3, 16),
        "conv2": init_conv(keys[1], 3, 3, 16, 32),
        "conv3": init_conv(keys[2], 3, 3, 32, 32),
        "psp1": init_conv(keys[3], 1, 1, 32, 8),
        "psp2": init_conv(keys[4], 1, 1, 32, 8),
        "psp3": init_conv(keys[5], 1, 1, 32, 8),
        "psp6": init_conv(keys[6], 1, 1, 32, 8),
        "final": init_conv(keys[7], 3, 3, 64, 32),
        "cls": init_conv(keys[8], 1, 1, 32, 3),
    }


# ---------------------------------------------------------------------------
# net_T forward (PSPNet -> raw trimap logits, NO softmax, NCHW in / NCHW out)
# ---------------------------------------------------------------------------
def net_t_forward(params, x_nchw):
    B, C, H, W = x_nchw.shape
    x = jnp.transpose(x_nchw, (0, 2, 3, 1)).astype(jnp.bfloat16)      # NHWC, bf16

    # backbone
    f = conv2d(x, *params["conv1"], stride=2, padding=1, relu=True)   # XLA conv (Cin=3)
    f = conv2d(f, *params["conv2"], stride=2, padding=1, relu=True)   # Pallas matmul
    f = conv2d(f, *params["conv3"], stride=1, padding=1, relu=True)   # Pallas fused conv
    _, Hf, Wf, _ = f.shape

    # pyramid pooling module (tiny -> XLA)
    branches = [f]
    for bins, name in ((1, "psp1"), (2, "psp2"), (3, "psp3"), (6, "psp6")):
        p = adaptive_avg_pool2d(f, bins)                              # (B,bins,bins,32)
        p = conv2d(p, *params[name], stride=1, padding=0, relu=True)  # (B,bins,bins,8)
        branches.append(bilinear_resize(p, Hf, Wf).astype(jnp.bfloat16))
    f = jnp.concatenate([br.astype(jnp.bfloat16) for br in branches], axis=-1)

    # classifier head
    f = conv2d(f, *params["final"], stride=1, padding=1, relu=True)   # Pallas fused conv
    logits = conv2d(f, *params["cls"], stride=1, padding=0, relu=False)  # XLA, f32

    # upsample to input resolution; trimap is returned WITHOUT softmax
    trimap = bilinear_resize(logits.astype(jnp.float32), H, W)        # (B,H,W,3) f32
    return jnp.transpose(trimap, (0, 3, 1, 2))                        # NCHW (B,3,H,W)


if __name__ == "__main__":
    params = init_params(seed=0)
    x = jax.random.normal(jax.random.PRNGKey(0), (2, 3, 32, 32), jnp.float32)
    fwd = jax.jit(net_t_forward)
    trimap = jax.block_until_ready(fwd(params, x))
    assert trimap.shape == (2, 3, 32, 32), trimap.shape
    assert bool(jnp.all(jnp.isfinite(trimap)))
    print("KERNEL_OK")
</pallas_src>

<mosaic_0001>
module attributes {stable_mosaic.version = 11 : i64} {
  func.func @_matmul_bias_act_kernel(%arg0: i32, %arg1: memref<128x144xbf16, #tpu.memory_space<vmem>>, %arg2: memref<144x32xbf16, #tpu.memory_space<vmem>>, %arg3: memref<1x32xf32, #tpu.memory_space<vmem>>, %arg4: memref<128x32xbf16, #tpu.memory_space<vmem>>) attributes {dimension_semantics = [#tpu.dimension_semantics<parallel>], iteration_bounds = array<i64: 1>, scalar_prefetch = 0 : i64, scratch_operands = 0 : i64, tpu.core_type = #tpu.core_type<tc>, window_params = [{transform_indices = @transform_0, window_bounds = array<i64: 128, 144>}, {pipeline_mode = #tpu.pipeline_mode<synchronous>, transform_indices = @transform_1, window_bounds = array<i64: 144, 32>}, {pipeline_mode = #tpu.pipeline_mode<synchronous>, transform_indices = @transform_2, window_bounds = array<i64: 1, 32>}, {transform_indices = @transform_3, window_bounds = array<i64: 128, 32>}]} {
    %c0 = arith.constant 0 : index
    %c0_0 = arith.constant 0 : index
    %0 = vector.load %arg1[%c0, %c0_0] : memref<128x144xbf16, #tpu.memory_space<vmem>>, vector<128x144xbf16>
    %c0_1 = arith.constant 0 : index
    %c0_2 = arith.constant 0 : index
    %1 = vector.load %arg2[%c0_1, %c0_2] : memref<144x32xbf16, #tpu.memory_space<vmem>>, vector<144x32xbf16>
    %cst = arith.constant dense<0.000000e+00> : vector<128x32xf32>
    %2 = tpu.matmul %0, %1, %cst {dimension_numbers = #tpu.dot_dimension_numbers<[1], [0], [0], [1], [0, 0, 1, 1], [], []>} : vector<128x144xbf16>, vector<144x32xbf16>, vector<128x32xf32> -> vector<128x32xf32>
    %c0_3 = arith.constant 0 : index
    %c0_4 = arith.constant 0 : index
    %3 = vector.load %arg3[%c0_3, %c0_4] : memref<1x32xf32, #tpu.memory_space<vmem>>, vector<1x32xf32>
    %4 = vector.broadcast %3 : vector<1x32xf32> to vector<128x32xf32>
    %5 = arith.addf %2, %4 : vector<128x32xf32>
    %cst_5 = arith.constant 0.000000e+00 : f32
    %6 = vector.broadcast %cst_5 : f32 to vector<128x32xf32>
    %7 = arith.maximumf %5, %6 : vector<128x32xf32>
    %8 = arith.truncf %7 : vector<128x32xf32> to vector<128x32xbf16>
    %c0_6 = arith.constant 0 : index
    %c0_7 = arith.constant 0 : index
    %9 = vector.load %arg4[%c0_6, %c0_7] : memref<128x32xbf16, #tpu.memory_space<vmem>>, vector<128x32xbf16>
    tpu.vector_store %arg4[%c0_6, %c0_7], %8 {strides = array<i32>} : memref<128x32xbf16, #tpu.memory_space<vmem>>, vector<128x32xbf16>,
    return
  }
  func.func @transform_0(%arg0: i32) -> (i32, i32) {
    %c0_i32 = arith.constant 0 : i32
    %c0_i32_0 = arith.constant 0 : i32
    return %arg0, %c0_i32 : i32, i32
  }
  func.func @transform_1(%arg0: i32) -> (i32, i32) {
    %c0_i32 = arith.constant 0 : i32
    %c0_i32_0 = arith.constant 0 : i32
    %c0_i32_1 = arith.constant 0 : i32
    return %c0_i32, %c0_i32_0 : i32, i32
  }
  func.func @transform_2(%arg0: i32) -> (i32, i32) {
    %c0_i32 = arith.constant 0 : i32
    %c0_i32_0 = arith.constant 0 : i32
    %c0_i32_1 = arith.constant 0 : i32
    return %c0_i32, %c0_i32_0 : i32, i32
  }
  func.func @transform_3(%arg0: i32) -> (i32, i32) {
    %c0_i32 = arith.constant 0 : i32
    %c0_i32_0 = arith.constant 0 : i32
    return %arg0, %c0_i32 : i32, i32
  }
}

module attributes {stable_mosaic.version = 11 : i64} {
  func.func @_fused_conv_kernel(%arg0: i32, %arg1: memref<1x10x10x32xbf16, #tpu.memory_space<vmem>>, %arg2: memref<9x32x32xbf16, #tpu.memory_space<vmem>>, %arg3: memref<1x32xf32, #tpu.memory_space<vmem>>, %arg4: memref<1x8x8x32xbf16, #tpu.memory_space<vmem>>) attributes {dimension_semantics = [#tpu.dimension_semantics<parallel>], iteration_bounds = array<i64: 2>, scalar_prefetch = 0 : i64, scratch_operands = 0 : i64, tpu.core_type = #tpu.core_type<tc>, window_params = [{transform_indices = @transform_0, window_bounds = array<i64: 1, 10, 10, 32>}, {pipeline_mode = #tpu.pipeline_mode<synchronous>, transform_indices = @transform_1, window_bounds = array<i64: 9, 32, 32>}, {pipeline_mode = #tpu.pipeline_mode<synchronous>, transform_indices = @transform_2, window_bounds = array<i64: 1, 32>}, {transform_indices = @transform_3, window_bounds = array<i64: 1, 8, 8, 32>}]} {
    %c0 = arith.constant 0 : index
    %c0_0 = arith.constant 0 : index
    %0 = vector.load %arg3[%c0, %c0_0] : memref<1x32xf32, #tpu.memory_space<vmem>>, vector<1x32xf32>
    %c0_i32 = arith.constant 0 : i32
    %c8_i32 = arith.constant 8 : i32
    %1 = arith.addi %c0_i32, %c8_i32 : i32
    %c1_i32 = arith.constant 1 : i32
    scf.for %arg5 = %c0_i32 to %1 step %c1_i32  : i32 {
      %cst = arith.constant 0.000000e+00 : f32
      %2 = vector.broadcast %cst : f32 to vector<8x32xf32>
      %c0_i32_2 = arith.constant 0 : i32
      %3 = arith.addi %arg5, %c0_i32_2 : i32
      %c0_3 = arith.constant 0 : index
      %4 = arith.index_cast %3 : i32 to index
      %c0_4 = arith.constant 0 : index
      %c0_5 = arith.constant 0 : index
      %5 = vector.load %arg1[%c0_3, %4, %c0_4, %c0_5] : memref<1x10x10x32xbf16, #tpu.memory_space<vmem>>, vector<1x1x8x32xbf16>
      %6 = vector.shape_cast %5 : vector<1x1x8x32xbf16> to vector<8x32xbf16>
      %c0_6 = arith.constant 0 : index
      %c0_7 = arith.constant 0 : index
      %c0_8 = arith.constant 0 : index
      %7 = vector.load %arg2[%c0_6, %c0_7, %c0_8] : memref<9x32x32xbf16, #tpu.memory_space<vmem>>, vector<1x32x32xbf16>
      %8 = vector.shape_cast %7 : vector<1x32x32xbf16> to vector<32x32xbf16>
      %cst_9 = arith.constant dense<0.000000e+00> : vector<8x32xf32>
      %9 = tpu.matmul %6, %8, %cst_9 {dimension_numbers = #tpu.dot_dimension_numbers<[1], [0], [0], [1], [0, 0, 1, 1], [], []>} : vector<8x32xbf16>, vector<32x32xbf16>, vector<8x32xf32> -> vector<8x32xf32>
      %10 = arith.addf %2, %9 : vector<8x32xf32>
      %c0_i32_10 = arith.constant 0 : i32
      %11 = arith.addi %arg5, %c0_i32_10 : i32
      %c0_11 = arith.constant 0 : index
      %12 = arith.index_cast %11 : i32 to index
      %c1 = arith.constant 1 : index
      %c0_12 = arith.constant 0 : index
      %13 = vector.load %arg1[%c0_11, %12, %c1, %c0_12] : memref<1x10x10x32xbf16, #tpu.memory_space<vmem>>, vector<1x1x8x32xbf16>
      %14 = vector.shape_cast %13 : vector<1x1x8x32xbf16> to vector<8x32xbf16>
      %c1_13 = arith.constant 1 : index
      %c0_14 = arith.constant 0 : index
      %c0_15 = arith.constant 0 : index
      %15 = vector.load %arg2[%c1_13, %c0_14, %c0_15] : memref<9x32x32xbf16, #tpu.memory_space<vmem>>, vector<1x32x32xbf16>
      %16 = vector.shape_cast %15 : vector<1x32x32xbf16> to vector<32x32xbf16>
      %cst_16 = arith.constant dense<0.000000e+00> : vector<8x32xf32>
      %17 = tpu.matmul %14, %16, %cst_16 {dimension_numbers = #tpu.dot_dimension_numbers<[1], [0], [0], [1], [0, 0, 1, 1], [], []>} : vector<8x32xbf16>, vector<32x32xbf16>, vector<8x32xf32> -> vector<8x32xf32>
      %18 = arith.addf %10, %17 : vector<8x32xf32>
      %c0_i32_17 = arith.constant 0 : i32
      %19 = arith.addi %arg5, %c0_i32_17 : i32
      %c0_18 = arith.constant 0 : index
      %20 = arith.index_cast %19 : i32 to index
      %c2 = arith.constant 2 : index
      %c0_19 = arith.constant 0 : index
      %21 = vector.load %arg1[%c0_18, %20, %c2, %c0_19] : memref<1x10x10x32xbf16, #tpu.memory_space<vmem>>, vector<1x1x8x32xbf16>
      %22 = vector.shape_cast %21 : vector<1x1x8x32xbf16> to vector<8x32xbf16>
      %c2_20 = arith.constant 2 : index
      %c0_21 = arith.constant 0 : index
      %c0_22 = arith.constant 0 : index
      %23 = vector.load %arg2[%c2_20, %c0_21, %c0_22] : memref<9x32x32xbf16, #tpu.memory_space<vmem>>, vector<1x32x32xbf16>
      %24 = vector.shape_cast %23 : vector<1x32x32xbf16> to vector<32x32xbf16>
      %cst_23 = arith.constant dense<0.000000e+00> : vector<8x32xf32>
      %25 = tpu.matmul %22, %24, %cst_23 {dimension_numbers = #tpu.dot_dimension_numbers<[1], [0], [0], [1], [0, 0, 1, 1], [], []>} : vector<8x32xbf16>, vector<32x32xbf16>, vector<8x32xf32> -> vector<8x32xf32>
      %26 = arith.addf %18, %25 : vector<8x32xf32>
      %c1_i32_24 = arith.constant 1 : i32
      %27 = arith.addi %arg5, %c1_i32_24 : i32
      %c0_25 = arith.constant 0 : index
      %28 = arith.index_cast %27 : i32 to index
      %c0_26 = arith.constant 0 : index
      %c0_27 = arith.constant 0 : index
      %29 = vector.load %arg1[%c0_25, %28, %c0_26, %c0_27] : memref<1x10x10x32xbf16, #tpu.memory_space<vmem>>, vector<1x1x8x32xbf16>
      %30 = vector.shape_cast %29 : vector<1x1x8x32xbf16> to vector<8x32xbf16>
      %c3 = arith.constant 3 : index
      %c0_28 = arith.constant 0 : index
      %c0_29 = arith.constant 0 : index
      %31 = vector.load %arg2[%c3, %c0_28, %c0_29] : memref<9x32x32xbf16, #tpu.memory_space<vmem>>, vector<1x32x32xbf16>
      %32 = vector.shape_cast %31 : vector<1x32x32xbf16> to vector<32x32xbf16>
      %cst_30 = arith.constant dense<0.000000e+00> : vector<8x32xf32>
      %33 = tpu.matmul %30, %32, %cst_30 {dimension_numbers = #tpu.dot_dimension_numbers<[1], [0], [0], [1], [0, 0, 1, 1], [], []>} : vector<8x32xbf16>, vector<32x32xbf16>, vector<8x32xf32> -> vector<8x32xf32>
      %34 = arith.addf %26, %33 : vector<8x32xf32>
      %c1_i32_31 = arith.constant 1 : i32
      %35 = arith.addi %arg5, %c1_i32_31 : i32
      %c0_32 = arith.constant 0 : index
      %36 = arith.index_cast %35 : i32 to index
      %c1_33 = arith.constant 1 : index
      %c0_34 = arith.constant 0 : index
      %37 = vector.load %arg1[%c0_32, %36, %c1_33, %c0_34] : memref<1x10x10x32xbf16, #tpu.memory_space<vmem>>, vector<1x1x8x32xbf16>
      %38 = vector.shape_cast %37 : vector<1x1x8x32xbf16> to vector<8x32xbf16>
      %c4 = arith.constant 4 : index
      %c0_35 = arith.constant 0 : index
      %c0_36 = arith.constant 0 : index
      %39 = vector.load %arg2[%c4, %c0_35, %c0_36] : memref<9x32x32xbf16, #tpu.memory_space<vmem>>, vector<1x32x32xbf16>
      %40 = vector.shape_cast %39 : vector<1x32x32xbf16> to vector<32x32xbf16>
      %cst_37 = arith.constant dense<0.000000e+00> : vector<8x32xf32>
      %41 = tpu.matmul %38, %40, %cst_37 {dimension_numbers = #tpu.dot_dimension_numbers<[1], [0], [0], [1], [0, 0, 1, 1], [], []>} : vector<8x32xbf16>, vector<32x32xbf16>, vector<8x32xf32> -> vector<8x32xf32>
      %42 = arith.addf %34, %41 : vector<8x32xf32>
      %c1_i32_38 = arith.constant 1 : i32
      %43 = arith.addi %arg5, %c1_i32_38 : i32
      %c0_39 = arith.constant 0 : index
      %44 = arith.index_cast %43 : i32 to index
      %c2_40 = arith.constant 2 : index
      %c0_41 = arith.constant 0 : index
      %45 = vector.load %arg1[%c0_39, %44, %c2_40, %c0_41] : memref<1x10x10x32xbf16, #tpu.memory_space<vmem>>, vector<1x1x8x32xbf16>
      %46 = vector.shape_cast %45 : vector<1x1x8x32xbf16> to vector<8x32xbf16>
      %c5 = arith.constant 5 : index
      %c0_42 = arith.constant 0 : index
      %c0_43 = arith.constant 0 : index
      %47 = vector.load %arg2[%c5, %c0_42, %c0_43] : memref<9x32x32xbf16, #tpu.memory_space<vmem>>, vector<1x32x32xbf16>
      %48 = vector.shape_cast %47 : vector<1x32x32xbf16> to vector<32x32xbf16>
      %cst_44 = arith.constant dense<0.000000e+00> : vector<8x32xf32>
      %49 = tpu.matmul %46, %48, %cst_44 {dimension_numbers = #tpu.dot_dimension_numbers<[1], [0], [0], [1], [0, 0, 1, 1], [], []>} : vector<8x32xbf16>, vector<32x32xbf16>, vector<8x32xf32> -> vector<8x32xf32>
      %50 = arith.addf %42, %49 : vector<8x32xf32>
      %c2_i32 = arith.constant 2 : i32
      %51 = arith.addi %arg5, %c2_i32 : i32
      %c0_45 = arith.constant 0 : index
      %52 = arith.index_cast %51 : i32 to index
      %c0_46 = arith.constant 0 : index
      %c0_47 = arith.constant 0 : index
      %53 = vector.load %arg1[%c0_45, %52, %c0_46, %c0_47] : memref<1x10x10x32xbf16, #tpu.memory_space<vmem>>, vector<1x1x8x32xbf16>
      %54 = vector.shape_cast %53 : vector<1x1x8x32xbf16> to vector<8x32xbf16>
      %c6 = arith.constant 6 : index
      %c0_48 = arith.constant 0 : index
      %c0_49 = arith.constant 0 : index
      %55 = vector.load %arg2[%c6, %c0_48, %c0_49] : memref<9x32x32xbf16, #tpu.memory_space<vmem>>, vector<1x32x32xbf16>
      %56 = vector.shape_cast %55 : vector<1x32x32xbf16> to vector<32x32xbf16>
      %cst_50 = arith.constant dense<0.000000e+00> : vector<8x32xf32>
      %57 = tpu.matmul %54, %56, %cst_50 {dimension_numbers = #tpu.dot_dimension_numbers<[1], [0], [0], [1], [0, 0, 1, 1], [], []>} : vector<8x32xbf16>, vector<32x32xbf16>, vector<8x32xf32> -> vector<8x32xf32>
      %58 = arith.addf %50, %57 : vector<8x32xf32>
      %c2_i32_51 = arith.constant 2 : i32
      %59 = arith.addi %arg5, %c2_i32_51 : i32
      %c0_52 = arith.constant 0 : index
      %60 = arith.index_cast %59 : i32 to index
      %c1_53 = arith.constant 1 : index
      %c0_54 = arith.constant 0 : index
      %61 = vector.load %arg1[%c0_52, %60, %c1_53, %c0_54] : memref<1x10x10x32xbf16, #tpu.memory_space<vmem>>, vector<1x1x8x32xbf16>
      %62 = vector.shape_cast %61 : vector<1x1x8x32xbf16> to vector<8x32xbf16>
      %c7 = arith.constant 7 : index
      %c0_55 = arith.constant 0 : index
      %c0_56 = arith.constant 0 : index
      %63 = vector.load %arg2[%c7, %c0_55, %c0_56] : memref<9x32x32xbf16, #tpu.memory_space<vmem>>, vector<1x32x32xbf16>
      %64 = vector.shape_cast %63 : vector<1x32x32xbf16> to vector<32x32xbf16>
      %cst_57 = arith.constant dense<0.000000e+00> : vector<8x32xf32>
      %65 = tpu.matmul %62, %64, %cst_57 {dimension_numbers = #tpu.dot_dimension_numbers<[1], [0], [0], [1], [0, 0, 1, 1], [], []>} : vector<8x32xbf16>, vector<32x32xbf16>, vector<8x32xf32> -> vector<8x32xf32>
      %66 = arith.addf %58, %65 : vector<8x32xf32>
      %c2_i32_58 = arith.constant 2 : i32
      %67 = arith.addi %arg5, %c2_i32_58 : i32
      %c0_59 = arith.constant 0 : index
      %68 = arith.index_cast %67 : i32 to index
      %c2_60 = arith.constant 2 : index
      %c0_61 = arith.constant 0 : index
      %69 = vector.load %arg1[%c0_59, %68, %c2_60, %c0_61] : memref<1x10x10x32xbf16, #tpu.memory_space<vmem>>, vector<1x1x8x32xbf16>
      %70 = vector.shape_cast %69 : vector<1x1x8x32xbf16> to vector<8x32xbf16>
      %c8 = arith.constant 8 : index
      %c0_62 = arith.constant 0 : index
      %c0_63 = arith.constant 0 : index
      %71 = vector.load %arg2[%c8, %c0_62, %c0_63] : memref<9x32x32xbf16, #tpu.memory_space<vmem>>, vector<1x32x32xbf16>
      %72 = vector.shape_cast %71 : vector<1x32x32xbf16> to vector<32x32xbf16>
      %cst_64 = arith.constant dense<0.000000e+00> : vector<8x32xf32>
      %73 = tpu.matmul %70, %72, %cst_64 {dimension_numbers = #tpu.dot_dimension_numbers<[1], [0], [0], [1], [0, 0, 1, 1], [], []>} : vector<8x32xbf16>, vector<32x32xbf16>, vector<8x32xf32> -> vector<8x32xf32>
      %74 = arith.addf %66, %73 : vector<8x32xf32>
      %75 = vector.broadcast %0 : vector<1x32xf32> to vector<8x32xf32>
      %76 = arith.addf %74, %75 : vector<8x32xf32>
      %cst_65 = arith.constant 0.000000e+00 : f32
      %77 = vector.broadcast %cst_65 : f32 to vector<8x32xf32>
      %78 = arith.maximumf %76, %77 : vector<8x32xf32>
      %79 = arith.truncf %78 : vector<8x32xf32> to vector<8x32xbf16>
      %c0_66 = arith.constant 0 : index
      %80 = arith.index_cast %arg5 : i32 to index
      %c0_67 = arith.constant 0 : index
      %c0_68 = arith.constant 0 : index
      %81 = vector.load %arg4[%c0_66, %80, %c0_67, %c0_68] : memref<1x8x8x32xbf16, #tpu.memory_space<vmem>>, vector<1x1x8x32xbf16>
      %82 = vector.shape_cast %81 : vector<1x1x8x32xbf16> to vector<8x32xbf16>
      %83 = vector.shape_cast %79 : vector<8x32xbf16> to vector<1x1x8x32xbf16>
      tpu.vector_store %arg4[%c0_66, %80, %c0_67, %c0_68], %83 {strides = array<i32>} : memref<1x8x8x32xbf16, #tpu.memory_space<vmem>>, vector<1x1x8x32xbf16>,
    }
    %c8_i32_1 = arith.constant 8 : i32
    return
  }
  func.func @transform_0(%arg0: i32) -> (i32, i32, i32, i32) {
    %c0_i32 = arith.constant 0 : i32
    %c0_i32_0 = arith.constant 0 : i32
    %c0_i32_1 = arith.constant 0 : i32
    %c0_i32_2 = arith.constant 0 : i32
    return %arg0, %c0_i32, %c0_i32_0, %c0_i32_1 : i32, i32, i32, i32
  }
  func.func @transform_1(%arg0: i32) -> (i32, i32, i32) {
    %c0_i32 = arith.constant 0 : i32
    %c0_i32_0 = arith.constant 0 : i32
    %c0_i32_1 = arith.constant 0 : i32
    %c0_i32_2 = arith.constant 0 : i32
    return %c0_i32, %c0_i32_0, %c0_i32_1 : i32, i32, i32
  }
  func.func @transform_2(%arg0: i32) -> (i32, i32) {
    %c0_i32 = arith.constant 0 : i32
    %c0_i32_0 = arith.constant 0 : i32
    %c0_i32_1 = arith.constant 0 : i32
    return %c0_i32, %c0_i32_0 : i32, i32
  }
  func.func @transform_3(%arg0: i32) -> (i32, i32, i32, i32) {
    %c0_i32 = arith.constant 0 : i32
    %c0_i32_0 = arith.constant 0 : i32
    %c0_i32_1 = arith.constant 0 : i32
    %c0_i32_2 = arith.constant 0 : i32
    return %arg0, %c0_i32, %c0_i32_0, %c0_i32_1 : i32, i32, i32, i32
  }
}

module attributes {stable_mosaic.version = 11 : i64} {
  func.func @_fused_conv_kernel(%arg0: i32, %arg1: memref<1x10x10x64xbf16, #tpu.memory_space<vmem>>, %arg2: memref<9x64x32xbf16, #tpu.memory_space<vmem>>, %arg3: memref<1x32xf32, #tpu.memory_space<vmem>>, %arg4: memref<1x8x8x32xbf16, #tpu.memory_space<vmem>>) attributes {dimension_semantics = [#tpu.dimension_semantics<parallel>], iteration_bounds = array<i64: 2>, scalar_prefetch = 0 : i64, scratch_operands = 0 : i64, tpu.core_type = #tpu.core_type<tc>, window_params = [{transform_indices = @transform_0, window_bounds = array<i64: 1, 10, 10, 64>}, {pipeline_mode = #tpu.pipeline_mode<synchronous>, transform_indices = @transform_1, window_bounds = array<i64: 9, 64, 32>}, {pipeline_mode = #tpu.pipeline_mode<synchronous>, transform_indices = @transform_2, window_bounds = array<i64: 1, 32>}, {transform_indices = @transform_3, window_bounds = array<i64: 1, 8, 8, 32>}]} {
    %c0 = arith.constant 0 : index
    %c0_0 = arith.constant 0 : index
    %0 = vector.load %arg3[%c0, %c0_0] : memref<1x32xf32, #tpu.memory_space<vmem>>, vector<1x32xf32>
    %c0_i32 = arith.constant 0 : i32
    %c8_i32 = arith.constant 8 : i32
    %1 = arith.addi %c0_i32, %c8_i32 : i32
    %c1_i32 = arith.constant 1 : i32
    scf.for %arg5 = %c0_i32 to %1 step %c1_i32  : i32 {
      %cst = arith.constant 0.000000e+00 : f32
      %2 = vector.broadcast %cst : f32 to vector<8x32xf32>
      %c0_i32_2 = arith.constant 0 : i32
      %3 = arith.addi %arg5, %c0_i32_2 : i32
      %c0_3 = arith.constant 0 : index
      %4 = arith.index_cast %3 : i32 to index
      %c0_4 = arith.constant 0 : index
      %c0_5 = arith.constant 0 : index
      %5 = vector.load %arg1[%c0_3, %4, %c0_4, %c0_5] : memref<1x10x10x64xbf16, #tpu.memory_space<vmem>>, vector<1x1x8x64xbf16>
      %6 = vector.shape_cast %5 : vector<1x1x8x64xbf16> to vector<8x64xbf16>
      %c0_6 = arith.constant 0 : index
      %c0_7 = arith.constant 0 : index
      %c0_8 = arith.constant 0 : index
      %7 = vector.load %arg2[%c0_6, %c0_7, %c0_8] : memref<9x64x32xbf16, #tpu.memory_space<vmem>>, vector<1x64x32xbf16>
      %8 = vector.shape_cast %7 : vector<1x64x32xbf16> to vector<64x32xbf16>
      %cst_9 = arith.constant dense<0.000000e+00> : vector<8x32xf32>
      %9 = tpu.matmul %6, %8, %cst_9 {dimension_numbers = #tpu.dot_dimension_numbers<[1], [0], [0], [1], [0, 0, 1, 1], [], []>} : vector<8x64xbf16>, vector<64x32xbf16>, vector<8x32xf32> -> vector<8x32xf32>
      %10 = arith.addf %2, %9 : vector<8x32xf32>
      %c0_i32_10 = arith.constant 0 : i32
      %11 = arith.addi %arg5, %c0_i32_10 : i32
      %c0_11 = arith.constant 0 : index
      %12 = arith.index_cast %11 : i32 to index
      %c1 = arith.constant 1 : index
      %c0_12 = arith.constant 0 : index
      %13 = vector.load %arg1[%c0_11, %12, %c1, %c0_12] : memref<1x10x10x64xbf16, #tpu.memory_space<vmem>>, vector<1x1x8x64xbf16>
      %14 = vector.shape_cast %13 : vector<1x1x8x64xbf16> to vector<8x64xbf16>
      %c1_13 = arith.constant 1 : index
      %c0_14 = arith.constant 0 : index
      %c0_15 = arith.constant 0 : index
      %15 = vector.load %arg2[%c1_13, %c0_14, %c0_15] : memref<9x64x32xbf16, #tpu.memory_space<vmem>>, vector<1x64x32xbf16>
      %16 = vector.shape_cast %15 : vector<1x64x32xbf16> to vector<64x32xbf16>
      %cst_16 = arith.constant dense<0.000000e+00> : vector<8x32xf32>
      %17 = tpu.matmul %14, %16, %cst_16 {dimension_numbers = #tpu.dot_dimension_numbers<[1], [0], [0], [1], [0, 0, 1, 1], [], []>} : vector<8x64xbf16>, vector<64x32xbf16>, vector<8x32xf32> -> vector<8x32xf32>
      %18 = arith.addf %10, %17 : vector<8x32xf32>
      %c0_i32_17 = arith.constant 0 : i32
      %19 = arith.addi %arg5, %c0_i32_17 : i32
      %c0_18 = arith.constant 0 : index
      %20 = arith.index_cast %19 : i32 to index
      %c2 = arith.constant 2 : index
      %c0_19 = arith.constant 0 : index
      %21 = vector.load %arg1[%c0_18, %20, %c2, %c0_19] : memref<1x10x10x64xbf16, #tpu.memory_space<vmem>>, vector<1x1x8x64xbf16>
      %22 = vector.shape_cast %21 : vector<1x1x8x64xbf16> to vector<8x64xbf16>
      %c2_20 = arith.constant 2 : index
      %c0_21 = arith.constant 0 : index
      %c0_22 = arith.constant 0 : index
      %23 = vector.load %arg2[%c2_20, %c0_21, %c0_22] : memref<9x64x32xbf16, #tpu.memory_space<vmem>>, vector<1x64x32xbf16>
      %24 = vector.shape_cast %23 : vector<1x64x32xbf16> to vector<64x32xbf16>
      %cst_23 = arith.constant dense<0.000000e+00> : vector<8x32xf32>
      %25 = tpu.matmul %22, %24, %cst_23 {dimension_numbers = #tpu.dot_dimension_numbers<[1], [0], [0], [1], [0, 0, 1, 1], [], []>} : vector<8x64xbf16>, vector<64x32xbf16>, vector<8x32xf32> -> vector<8x32xf32>
      %26 = arith.addf %18, %25 : vector<8x32xf32>
      %c1_i32_24 = arith.constant 1 : i32
      %27 = arith.addi %arg5, %c1_i32_24 : i32
      %c0_25 = arith.constant 0 : index
      %28 = arith.index_cast %27 : i32 to index
      %c0_26 = arith.constant 0 : index
      %c0_27 = arith.constant 0 : index
      %29 = vector.load %arg1[%c0_25, %28, %c0_26, %c0_27] : memref<1x10x10x64xbf16, #tpu.memory_space<vmem>>, vector<1x1x8x64xbf16>
      %30 = vector.shape_cast %29 : vector<1x1x8x64xbf16> to vector<8x64xbf16>
      %c3 = arith.constant 3 : index
      %c0_28 = arith.constant 0 : index
      %c0_29 = arith.constant 0 : index
      %31 = vector.load %arg2[%c3, %c0_28, %c0_29] : memref<9x64x32xbf16, #tpu.memory_space<vmem>>, vector<1x64x32xbf16>
      %32 = vector.shape_cast %31 : vector<1x64x32xbf16> to vector<64x32xbf16>
      %cst_30 = arith.constant dense<0.000000e+00> : vector<8x32xf32>
      %33 = tpu.matmul %30, %32, %cst_30 {dimension_numbers = #tpu.dot_dimension_numbers<[1], [0], [0], [1], [0, 0, 1, 1], [], []>} : vector<8x64xbf16>, vector<64x32xbf16>, vector<8x32xf32> -> vector<8x32xf32>
      %34 = arith.addf %26, %33 : vector<8x32xf32>
      %c1_i32_31 = arith.constant 1 : i32
      %35 = arith.addi %arg5, %c1_i32_31 : i32
      %c0_32 = arith.constant 0 : index
      %36 = arith.index_cast %35 : i32 to index
      %c1_33 = arith.constant 1 : index
      %c0_34 = arith.constant 0 : index
      %37 = vector.load %arg1[%c0_32, %36, %c1_33, %c0_34] : memref<1x10x10x64xbf16, #tpu.memory_space<vmem>>, vector<1x1x8x64xbf16>
      %38 = vector.shape_cast %37 : vector<1x1x8x64xbf16> to vector<8x64xbf16>
      %c4 = arith.constant 4 : index
      %c0_35 = arith.constant 0 : index
      %c0_36 = arith.constant 0 : index
      %39 = vector.load %arg2[%c4, %c0_35, %c0_36] : memref<9x64x32xbf16, #tpu.memory_space<vmem>>, vector<1x64x32xbf16>
      %40 = vector.shape_cast %39 : vector<1x64x32xbf16> to vector<64x32xbf16>
      %cst_37 = arith.constant dense<0.000000e+00> : vector<8x32xf32>
      %41 = tpu.matmul %38, %40, %cst_37 {dimension_numbers = #tpu.dot_dimension_numbers<[1], [0], [0], [1], [0, 0, 1, 1], [], []>} : vector<8x64xbf16>, vector<64x32xbf16>, vector<8x32xf32> -> vector<8x32xf32>
      %42 = arith.addf %34, %41 : vector<8x32xf32>
      %c1_i32_38 = arith.constant 1 : i32
      %43 = arith.addi %arg5, %c1_i32_38 : i32
      %c0_39 = arith.constant 0 : index
      %44 = arith.index_cast %43 : i32 to index
      %c2_40 = arith.constant 2 : index
      %c0_41 = arith.constant 0 : index
      %45 = vector.load %arg1[%c0_39, %44, %c2_40, %c0_41] : memref<1x10x10x64xbf16, #tpu.memory_space<vmem>>, vector<1x1x8x64xbf16>
      %46 = vector.shape_cast %45 : vector<1x1x8x64xbf16> to vector<8x64xbf16>
      %c5 = arith.constant 5 : index
      %c0_42 = arith.constant 0 : index
      %c0_43 = arith.constant 0 : index
      %47 = vector.load %arg2[%c5, %c0_42, %c0_43] : memref<9x64x32xbf16, #tpu.memory_space<vmem>>, vector<1x64x32xbf16>
      %48 = vector.shape_cast %47 : vector<1x64x32xbf16> to vector<64x32xbf16>
      %cst_44 = arith.constant dense<0.000000e+00> : vector<8x32xf32>
      %49 = tpu.matmul %46, %48, %cst_44 {dimension_numbers = #tpu.dot_dimension_numbers<[1], [0], [0], [1], [0, 0, 1, 1], [], []>} : vector<8x64xbf16>, vector<64x32xbf16>, vector<8x32xf32> -> vector<8x32xf32>
      %50 = arith.addf %42, %49 : vector<8x32xf32>
      %c2_i32 = arith.constant 2 : i32
      %51 = arith.addi %arg5, %c2_i32 : i32
      %c0_45 = arith.constant 0 : index
      %52 = arith.index_cast %51 : i32 to index
      %c0_46 = arith.constant 0 : index
      %c0_47 = arith.constant 0 : index
      %53 = vector.load %arg1[%c0_45, %52, %c0_46, %c0_47] : memref<1x10x10x64xbf16, #tpu.memory_space<vmem>>, vector<1x1x8x64xbf16>
      %54 = vector.shape_cast %53 : vector<1x1x8x64xbf16> to vector<8x64xbf16>
      %c6 = arith.constant 6 : index
      %c0_48 = arith.constant 0 : index
      %c0_49 = arith.constant 0 : index
      %55 = vector.load %arg2[%c6, %c0_48, %c0_49] : memref<9x64x32xbf16, #tpu.memory_space<vmem>>, vector<1x64x32xbf16>
      %56 = vector.shape_cast %55 : vector<1x64x32xbf16> to vector<64x32xbf16>
      %cst_50 = arith.constant dense<0.000000e+00> : vector<8x32xf32>
      %57 = tpu.matmul %54, %56, %cst_50 {dimension_numbers = #tpu.dot_dimension_numbers<[1], [0], [0], [1], [0, 0, 1, 1], [], []>} : vector<8x64xbf16>, vector<64x32xbf16>, vector<8x32xf32> -> vector<8x32xf32>
      %58 = arith.addf %50, %57 : vector<8x32xf32>
      %c2_i32_51 = arith.constant 2 : i32
      %59 = arith.addi %arg5, %c2_i32_51 : i32
      %c0_52 = arith.constant 0 : index
      %60 = arith.index_cast %59 : i32 to index
      %c1_53 = arith.constant 1 : index
      %c0_54 = arith.constant 0 : index
      %61 = vector.load %arg1[%c0_52, %60, %c1_53, %c0_54] : memref<1x10x10x64xbf16, #tpu.memory_space<vmem>>, vector<1x1x8x64xbf16>
      %62 = vector.shape_cast %61 : vector<1x1x8x64xbf16> to vector<8x64xbf16>
      %c7 = arith.constant 7 : index
      %c0_55 = arith.constant 0 : index
      %c0_56 = arith.constant 0 : index
      %63 = vector.load %arg2[%c7, %c0_55, %c0_56] : memref<9x64x32xbf16, #tpu.memory_space<vmem>>, vector<1x64x32xbf16>
      %64 = vector.shape_cast %63 : vector<1x64x32xbf16> to vector<64x32xbf16>
      %cst_57 = arith.constant dense<0.000000e+00> : vector<8x32xf32>
      %65 = tpu.matmul %62, %64, %cst_57 {dimension_numbers = #tpu.dot_dimension_numbers<[1], [0], [0], [1], [0, 0, 1, 1], [], []>} : vector<8x64xbf16>, vector<64x32xbf16>, vector<8x32xf32> -> vector<8x32xf32>
      %66 = arith.addf %58, %65 : vector<8x32xf32>
      %c2_i32_58 = arith.constant 2 : i32
      %67 = arith.addi %arg5, %c2_i32_58 : i32
      %c0_59 = arith.constant 0 : index
      %68 = arith.index_cast %67 : i32 to index
      %c2_60 = arith.constant 2 : index
      %c0_61 = arith.constant 0 : index
      %69 = vector.load %arg1[%c0_59, %68, %c2_60, %c0_61] : memref<1x10x10x64xbf16, #tpu.memory_space<vmem>>, vector<1x1x8x64xbf16>
      %70 = vector.shape_cast %69 : vector<1x1x8x64xbf16> to vector<8x64xbf16>
      %c8 = arith.constant 8 : index
      %c0_62 = arith.constant 0 : index
      %c0_63 = arith.constant 0 : index
      %71 = vector.load %arg2[%c8, %c0_62, %c0_63] : memref<9x64x32xbf16, #tpu.memory_space<vmem>>, vector<1x64x32xbf16>
      %72 = vector.shape_cast %71 : vector<1x64x32xbf16> to vector<64x32xbf16>
      %cst_64 = arith.constant dense<0.000000e+00> : vector<8x32xf32>
      %73 = tpu.matmul %70, %72, %cst_64 {dimension_numbers = #tpu.dot_dimension_numbers<[1], [0], [0], [1], [0, 0, 1, 1], [], []>} : vector<8x64xbf16>, vector<64x32xbf16>, vector<8x32xf32> -> vector<8x32xf32>
      %74 = arith.addf %66, %73 : vector<8x32xf32>
      %75 = vector.broadcast %0 : vector<1x32xf32> to vector<8x32xf32>
      %76 = arith.addf %74, %75 : vector<8x32xf32>
      %cst_65 = arith.constant 0.000000e+00 : f32
      %77 = vector.broadcast %cst_65 : f32 to vector<8x32xf32>
      %78 = arith.maximumf %76, %77 : vector<8x32xf32>
      %79 = arith.truncf %78 : vector<8x32xf32> to vector<8x32xbf16>
      %c0_66 = arith.constant 0 : index
      %80 = arith.index_cast %arg5 : i32 to index
      %c0_67 = arith.constant 0 : index
      %c0_68 = arith.constant 0 : index
      %81 = vector.load %arg4[%c0_66, %80, %c0_67, %c0_68] : memref<1x8x8x32xbf16, #tpu.memory_space<vmem>>, vector<1x1x8x32xbf16>
      %82 = vector.shape_cast %81 : vector<1x1x8x32xbf16> to vector<8x32xbf16>
      %83 = vector.shape_cast %79 : vector<8x32xbf16> to vector<1x1x8x32xbf16>
      tpu.vector_store %arg4[%c0_66, %80, %c0_67, %c0_68], %83 {strides = array<i32>} : memref<1x8x8x32xbf16, #tpu.memory_space<vmem>>, vector<1x1x8x32xbf16>,
    }
    %c8_i32_1 = arith.constant 8 : i32
    return
  }
  func.func @transform_0(%arg0: i32) -> (i32, i32, i32, i32) {
    %c0_i32 = arith.constant 0 : i32
    %c0_i32_0 = arith.constant 0 : i32
    %c0_i32_1 = arith.constant 0 : i32
    %c0_i32_2 = arith.constant 0 : i32
    return %arg0, %c0_i32, %c0_i32_0, %c0_i32_1 : i32, i32, i32, i32
  }
  func.func @transform_1(%arg0: i32) -> (i32, i32, i32) {
    %c0_i32 = arith.constant 0 : i32
    %c0_i32_0 = arith.constant 0 : i32
    %c0_i32_1 = arith.constant 0 : i32
    %c0_i32_2 = arith.constant 0 : i32
    return %c0_i32, %c0_i32_0, %c0_i32_1 : i32, i32, i32
  }
  func.func @transform_2(%arg0: i32) -> (i32, i32) {
    %c0_i32 = arith.constant 0 : i32
    %c0_i32_0 = arith.constant 0 : i32
    %c0_i32_1 = arith.constant 0 : i32
    return %c0_i32, %c0_i32_0 : i32, i32
  }
  func.func @transform_3(%arg0: i32) -> (i32, i32, i32, i32) {
    %c0_i32 = arith.constant 0 : i32
    %c0_i32_0 = arith.constant 0 : i32
    %c0_i32_1 = arith.constant 0 : i32
    %c0_i32_2 = arith.constant 0 : i32
    return %arg0, %c0_i32, %c0_i32_0, %c0_i32_1 : i32, i32, i32, i32
  }
}

</mosaic_0001>

<llo_original>
// kernel: net_t_forward.3
$region0: #{net_t_forward.3}
  #allocation0 [shape = 'u32[]', space=smem, size = 0x4, offset = 0x4, fixed_abs, tag = 'smem constant byte address 0x4 - core index']
  #allocation1 [shape = 'u32[144,128]{1,0:T(1,128)}', space=vmem, size = 0x12000, scoped, tag = 'internal scratch']
  %s0 = inlined_call_operand.vmem [shape: bf16[128,144], index: 0, kind: input, shape index: {}]
  %s1 = inlined_call_operand.vmem [shape: bf16[144,32], index: 1, kind: input, shape index: {}]
  %s2 = inlined_call_operand.vmem [shape: f32[1,32], index: 2, kind: input, shape index: {}]
  %s3 = inlined_call_operand.vmem [shape: bf16[128,32], index: 3, kind: output, shape index: {}]
  %s4 = sld [smem:[#allocation0]]
  $region22: #{net_t_forward.3} parent=0
    _
  %s6 = ssub.s32 1, %s4
  %s7 = scalar_select 0, %s6, %s4
  // Predicated region
  $region2: #{net_t_forward.3} parent=0 // pred_check
    _
  $region3: #{net_t_forward.3} parent=0 // pred_check_branch
    %9 = sbr.rel (0) target = $region5
  $region4: #{net_t_forward.3} parent=0 // pred_region
    _
  $region5: #{net_t_forward.3} parent=0 // pred_fallthru
    _
  // Predicated region
  $region6: #{net_t_forward.3} parent=0 // pred_check
    _
  $region7: #{net_t_forward.3} parent=0 // pred_check_branch
    %11 = sbr.rel (0) target = $region9
  $region8: #{net_t_forward.3} parent=0 // pred_region
    _
  $region9: #{net_t_forward.3} parent=0 // pred_fallthru
    _
  // Predicated region
  $region10: #{net_t_forward.3} parent=0 // pred_check
    _
  $region11: #{net_t_forward.3} parent=0 // pred_check_branch
    %13 = sbr.rel (0) target = $region13
  $region12: #{net_t_forward.3} parent=0 // pred_region
    _
  $region13: #{net_t_forward.3} parent=0 // pred_fallthru
    _
  %v15 = vld [vmem:[%s0] sm:$0xff]
  %v16 = vld [vmem:[%s0 + $0x8] sm:$0xff]
  %v17 = vld [vmem:[%s0 + $0x10] sm:$0xff]
  %v18 = vld [vmem:[%s0 + $0x18] sm:$0xff]
  %v19 = vld [vmem:[%s0 + $0x20] sm:$0xff]
  %v20 = vld [vmem:[%s0 + $0x28] sm:$0xff]
  %v21 = vld [vmem:[%s0 + $0x30] sm:$0xff]
  %v22 = vld [vmem:[%s0 + $0x38] sm:$0xff]
  %v23 = vld [vmem:[%s0 + $0x40] sm:$0xff]
  %v24 = vld [vmem:[%s0 + $0x48] sm:$0xff]
  %v25 = vld [vmem:[%s0 + $0x50] sm:$0xff]
  %v26 = vld [vmem:[%s0 + $0x58] sm:$0xff]
  %v27 = vld [vmem:[%s0 + $0x60] sm:$0xff]
  %v28 = vld [vmem:[%s0 + $0x68] sm:$0xff]
  %v29 = vld [vmem:[%s0 + $0x70] sm:$0xff]
  %v30 = vld [vmem:[%s0 + $0x78] sm:$0xff]
  %v31 = vld [vmem:[%s1] sm:$0xf]
  %v32 = vld [vmem:[%s1 + $0x4] sm:$0xf]
  %v33 = vld [vmem:[%s1 + $0x8] sm:$0xf]
  %v34 = vld [vmem:[%s1 + $0xc] sm:$0xf]
  %v35 = vld [vmem:[%s1 + $0x10] sm:$0xf]
  %v36 = vld [vmem:[%s1 + $0x14] sm:$0xf]
  %v37 = vld [vmem:[%s1 + $0x18] sm:$0xf]
  %v38 = vld [vmem:[%s1 + $0x1c] sm:$0xf]
  %v39 = vld [vmem:[%s1 + $0x20] sm:$0xf]
  %v40 = vld [vmem:[%s1 + $0x24] sm:$0xf]
  %v41 = vld [vmem:[%s1 + $0x28] sm:$0xf]
  %v42 = vld [vmem:[%s1 + $0x2c] sm:$0xf]
  %v43 = vld [vmem:[%s1 + $0x30] sm:$0xf]
  %v44 = vld [vmem:[%s1 + $0x34] sm:$0xf]
  %v45 = vld [vmem:[%s1 + $0x38] sm:$0xf]
  %v46 = vld [vmem:[%s1 + $0x3c] sm:$0xf]
  %v47 = vld [vmem:[%s1 + $0x40] sm:$0xf]
  %v48 = vld [vmem:[%s1 + $0x44] sm:$0xf]
  %v49 = vld [vmem:[%s2] sm:$0x1]
  %v51 = vlaneseq
  %v52 = vshrl.u32 %v51, 7
  %v53 = vsub.s32 0, %v52
  %v54 = vrot.slane %v49, %v53
  %v72 = vunpack.c.l.b16 %v15
  %v73 = vunpack.c.h.b16 %v15
  %v74 = vunpack.c.l.b16 %v16
  %v75 = vunpack.c.h.b16 %v16
  %v76 = vunpack.c.l.b16 %v17
  %v77 = vunpack.c.h.b16 %v17
  %v78 = vunpack.c.l.b16 %v18
  %v79 = vunpack.c.h.b16 %v18
  %v80 = vunpack.c.l.b16 %v19
  %v81 = vunpack.c.h.b16 %v19
  %v82 = vunpack.c.l.b16 %v20
  %v83 = vunpack.c.h.b16 %v20
  %v84 = vunpack.c.l.b16 %v21
  %v85 = vunpack.c.h.b16 %v21
  %v86 = vunpack.c.l.b16 %v22
  %v87 = vunpack.c.h.b16 %v22
  %v88 = vunpack.c.l.b16 %v23
  %v89 = vunpack.c.h.b16 %v23
  %v90 = vunpack.c.l.b16 %v24
  %v91 = vunpack.c.h.b16 %v24
  %v92 = vunpack.c.l.b16 %v25
  %v93 = vunpack.c.h.b16 %v25
  %v94 = vunpack.c.l.b16 %v26
  %v95 = vunpack.c.h.b16 %v26
  %v96 = vunpack.c.l.b16 %v27
  %v97 = vunpack.c.h.b16 %v27
  %v98 = vunpack.c.l.b16 %v28
  %v99 = vunpack.c.h.b16 %v28
  %v100 = vunpack.c.l.b16 %v29
  %v101 = vunpack.c.h.b16 %v29
  %v102 = vunpack.c.l.b16 %v30
  %v103 = vunpack.c.h.b16 %v30
  %v104 = vpack.c.b16 %v74, %v72
  %v105 = vpack.c.b16 %v75, %v73
  %v106 = vpack.c.b16 %v78, %v76
  %v107 = vpack.c.b16 %v79, %v77
  %v108 = vpack.c.b16 %v82, %v80
  %v109 = vpack.c.b16 %v83, %v81
  %v110 = vpack.c.b16 %v86, %v84
  %v111 = vpack.c.b16 %v87, %v85
  %v112 = vpack.c.b16 %v90, %v88
  %v113 = vpack.c.b16 %v91, %v89
  %v114 = vpack.c.b16 %v94, %v92
  %v115 = vpack.c.b16 %v95, %v93
  %v116 = vpack.c.b16 %v98, %v96
  %v117 = vpack.c.b16 %v99, %v97
  %v118 = vpack.c.b16 %v102, %v100
  %v119 = vpack.c.b16 %v103, %v101
  %v146 = vunpack.c.l.b16 %v31
  %v147 = vunpack.c.l.b16 %v32
  %v148 = vunpack.c.l.b16 %v33
  %v149 = vunpack.c.l.b16 %v34
  %v150 = vunpack.c.l.b16 %v35
  %v151 = vunpack.c.l.b16 %v36
  %v152 = vunpack.c.l.b16 %v37
  %v153 = vunpack.c.l.b16 %v38
  %v154 = vunpack.c.l.b16 %v39
  %v155 = vunpack.c.l.b16 %v40
  %v156 = vunpack.c.l.b16 %v41
  %v157 = vunpack.c.l.b16 %v42
  %v158 = vunpack.c.l.b16 %v43
  %v159 = vunpack.c.l.b16 %v44
  %v160 = vunpack.c.l.b16 %v45
  %v161 = vunpack.c.l.b16 %v46
  %v162 = vunpack.c.l.b16 %v47
  %v163 = vunpack.c.l.b16 %v48
  %v164 = vpack.c.b16 %v147, %v146
  %v165 = vpack.c.b16 %v149, %v148
  %v166 = vpack.c.b16 %v151, %v150
  %v167 = vpack.c.b16 %v153, %v152
  %v168 = vpack.c.b16 %v155, %v154
  %v169 = vpack.c.b16 %v157, %v156
  %v170 = vpack.c.b16 %v159, %v158
  %v171 = vpack.c.b16 %v161, %v160
  %v172 = vpack.c.b16 %v163, %v162
  %vm182 = vcmask 130048
  %v184 = vsel %vm182, %v105, 0
  %v187 = vsel %vm182, %v107, 0
  %v190 = vsel %vm182, %v109, 0
  %v193 = vsel %vm182, %v111, 0
  %v196 = vsel %vm182, %v113, 0
  %v199 = vsel %vm182, %v115, 0
  %v202 = vsel %vm182, %v117, 0
  %v205 = vsel %vm182, %v119, 0
  %207 = vmatprep.subr.bf16.mxu0 0
  %208 = vmatpush1.bf16.msra.mxu0 %v171
  %209 = vmatprep.subr.bf16.mxu0 0
  %210 = vmatpush1.bf16.msra.mxu0 %v170
  %211 = vmatprep.subr.bf16.mxu0 0
  %212 = vmatpush1.bf16.msra.mxu0 %v169
  %213 = vmatprep.subr.bf16.mxu0 0
  %214 = vmatpush1.bf16.msra.mxu0 %v168
  %215 = vmatprep.subr.bf16.mxu0 0
  %216 = vmatpush1.bf16.msra.mxu0 %v167
  %217 = vmatprep.subr.bf16.mxu0 0
  %218 = vmatpush1.bf16.msra.mxu0 %v166
  %219 = vmatprep.subr.bf16.mxu0 0
  %220 = vmatpush1.bf16.msra.mxu0 %v165
  %221 = vmatprep.subr.bf16.mxu0 0
  %222 = vmatpush1.bf16.msra.mxu0 %v164
  %223 = vmatprep.subr.bf16.mxu0 0
  %224 = vmatpush2.bf16.msra.mxu0 0
  %225 = vmatprep.subr.bf16.mxu0 0
  %226 = vmatpush2.bf16.msra.mxu0 0
  %227 = vmatprep.subr.bf16.mxu0 0
  %228 = vmatpush2.bf16.msra.mxu0 0
  %229 = vmatprep.subr.bf16.mxu0 0
  %230 = vmatpush2.bf16.msra.mxu0 0
  %231 = vmatprep.subr.bf16.mxu0 0
  %232 = vmatpush2.bf16.msra.mxu0 0
  %233 = vmatprep.subr.bf16.mxu0 0
  %234 = vmatpush2.bf16.msra.mxu0 0
  %235 = vmatprep.subr.bf16.mxu0 0
  %236 = vmatpush2.bf16.msra.mxu0 0
  %237 = vmatprep.subr.bf16.mxu0 0
  %238 = vmatpush2.bf16.msra.mxu0 %v172
  %239 = vmatprep.mubr.bf16.mxu0 %v184
  %240 = vmatmul.mubr.bf16.gmra.mxu0 %v104
  %v241 = vpop.f32.mrf.mxu0
  %v242 = vadd.f32 %v54, %v241
  %v243 = vpop.f32.mrf.mxu0
  %v244 = vpop.f32.mrf.mxu0
  %v245 = vadd.f32 %v54, %v244
  %v246 = vpop.f32.mrf.mxu0
  %247 = vmatprep.mubr.bf16.mxu0 %v187
  %248 = vmatmul.mubr.bf16.gmra.mxu0 %v106
  %v249 = vpop.f32.mrf.mxu0
  %v250 = vadd.f32 %v54, %v249
  %v251 = vpop.f32.mrf.mxu0
  %v252 = vpop.f32.mrf.mxu0
  %v253 = vadd.f32 %v54, %v252
  %v254 = vpop.f32.mrf.mxu0
  %255 = vmatprep.mubr.bf16.mxu0 %v190
  %256 = vmatmul.mubr.bf16.gmra.mxu0 %v108
  %v257 = vpop.f32.mrf.mxu0
  %v258 = vadd.f32 %v54, %v257
  %v259 = vpop.f32.mrf.mxu0
  %v260 = vpop.f32.mrf.mxu0
  %v261 = vadd.f32 %v54, %v260
  %v262 = vpop.f32.mrf.mxu0
  %263 = vmatprep.mubr.bf16.mxu0 %v193
  %264 = vmatmul.mubr.bf16.gmra.mxu0 %v110
  %v265 = vpop.f32.mrf.mxu0
  %v266 = vadd.f32 %v54, %v265
  %v267 = vpop.f32.mrf.mxu0
  %v268 = vpop.f32.mrf.mxu0
  %v269 = vadd.f32 %v54, %v268
  %v270 = vpop.f32.mrf.mxu0
  %271 = vmatprep.mubr.bf16.mxu0 %v196
  %272 = vmatmul.mubr.bf16.gmra.mxu0 %v112
  %v273 = vpop.f32.mrf.mxu0
  %v274 = vadd.f32 %v54, %v273
  %v275 = vpop.f32.mrf.mxu0
  %v276 = vpop.f32.mrf.mxu0
  %v277 = vadd.f32 %v54, %v276
  %v278 = vpop.f32.mrf.mxu0
  %279 = vmatprep.mubr.bf16.mxu0 %v199
  %280 = vmatmul.mubr.bf16.gmra.mxu0 %v114
  %v281 = vpop.f32.mrf.mxu0
  %v282 = vadd.f32 %v54, %v281
  %v283 = vpop.f32.mrf.mxu0
  %v284 = vpop.f32.mrf.mxu0
  %v285 = vadd.f32 %v54, %v284
  %v286 = vpop.f32.mrf.mxu0
  %287 = vmatprep.mubr.bf16.mxu0 %v202
  %288 = vmatmul.mubr.bf16.gmra.mxu0 %v116
  %v289 = vpop.f32.mrf.mxu0
  %v290 = vadd.f32 %v54, %v289
  %v291 = vpop.f32.mrf.mxu0
  %v292 = vpop.f32.mrf.mxu0
  %v293 = vadd.f32 %v54, %v292
  %v294 = vpop.f32.mrf.mxu0
  %295 = vmatprep.mubr.bf16.mxu0 %v205
  %296 = vmatmul.mubr.bf16.gmra.mxu0 %v118
  %v297 = vpop.f32.mrf.mxu0
  %v298 = vadd.f32 %v54, %v297
  %v299 = vpop.f32.mrf.mxu0
  %v300 = vpop.f32.mrf.mxu0
  %v301 = vadd.f32 %v54, %v300
  %v302 = vpop.f32.mrf.mxu0
  %303 = vdwg.mxu0
  %v304 = vmax.f32 %v242, 0.0
  %v305 = vmax.f32 %v245, 0.0
  %v306 = vmax.f32 %v250, 0.0
  %v307 = vmax.f32 %v253, 0.0
  %v308 = vmax.f32 %v258, 0.0
  %v309 = vmax.f32 %v261, 0.0
  %v310 = vmax.f32 %v266, 0.0
  %v311 = vmax.f32 %v269, 0.0
  %v312 = vmax.f32 %v274, 0.0
  %v313 = vmax.f32 %v277, 0.0
  %v314 = vmax.f32 %v282, 0.0
  %v315 = vmax.f32 %v285, 0.0
  %v316 = vmax.f32 %v290, 0.0
  %v317 = vmax.f32 %v293, 0.0
  %v318 = vmax.f32 %v298, 0.0
  %v319 = vmax.f32 %v301, 0.0
  %v320 = vpack.c.bf16 %v305, %v304
  %v321 = vpack.c.bf16 %v307, %v306
  %v322 = vpack.c.bf16 %v309, %v308
  %v323 = vpack.c.bf16 %v311, %v310
  %v324 = vpack.c.bf16 %v313, %v312
  %v325 = vpack.c.bf16 %v315, %v314
  %v326 = vpack.c.bf16 %v317, %v316
  %v327 = vpack.c.bf16 %v319, %v318
  %v336 = vunpack.c.l.b16 %v320
  %v337 = vunpack.c.h.b16 %v320
  %v338 = vunpack.c.l.b16 %v321
  %v339 = vunpack.c.h.b16 %v321
  %v340 = vunpack.c.l.b16 %v322
  %v341 = vunpack.c.h.b16 %v322
  %v342 = vunpack.c.l.b16 %v323
  %v343 = vunpack.c.h.b16 %v323
  %v344 = vunpack.c.l.b16 %v324
  %v345 = vunpack.c.h.b16 %v324
  %v346 = vunpack.c.l.b16 %v325
  %v347 = vunpack.c.h.b16 %v325
  %v348 = vunpack.c.l.b16 %v326
  %v349 = vunpack.c.h.b16 %v326
  %v350 = vunpack.c.l.b16 %v327
  %v351 = vunpack.c.h.b16 %v327
  %v352 = vpack.c.b16 %v336, %v336
  %v353 = vpack.c.b16 %v337, %v337
  %v354 = vpack.c.b16 %v338, %v338
  %v355 = vpack.c.b16 %v339, %v339
  %v356 = vpack.c.b16 %v340, %v340
  %v357 = vpack.c.b16 %v341, %v341
  %v358 = vpack.c.b16 %v342, %v342
  %v359 = vpack.c.b16 %v343, %v343
  %v360 = vpack.c.b16 %v344, %v344
  %v361 = vpack.c.b16 %v345, %v345
  %v362 = vpack.c.b16 %v346, %v346
  %v363 = vpack.c.b16 %v347, %v347
  %v364 = vpack.c.b16 %v348, %v348
  %v365 = vpack.c.b16 %v349, %v349
  %v366 = vpack.c.b16 %v350, %v350
  %v367 = vpack.c.b16 %v351, %v351
  %vm384 = vcmask 257024
  %385 = vst.msk [vmem:[%s3] sm:$0xf] %vm384, %v352
  %386 = vst.msk [vmem:[%s3 + $0x4] sm:$0xf] %vm384, %v353
  %387 = vst.msk [vmem:[%s3 + $0x8] sm:$0xf] %vm384, %v354
  %388 = vst.msk [vmem:[%s3 + $0xc] sm:$0xf] %vm384, %v355
  %389 = vst.msk [vmem:[%s3 + $0x10] sm:$0xf] %vm384, %v356
  %390 = vst.msk [vmem:[%s3 + $0x14] sm:$0xf] %vm384, %v357
  %391 = vst.msk [vmem:[%s3 + $0x18] sm:$0xf] %vm384, %v358
  %392 = vst.msk [vmem:[%s3 + $0x1c] sm:$0xf] %vm384, %v359
  %393 = vst.msk [vmem:[%s3 + $0x20] sm:$0xf] %vm384, %v360
  %394 = vst.msk [vmem:[%s3 + $0x24] sm:$0xf] %vm384, %v361
  %395 = vst.msk [vmem:[%s3 + $0x28] sm:$0xf] %vm384, %v362
  %396 = vst.msk [vmem:[%s3 + $0x2c] sm:$0xf] %vm384, %v363
  %397 = vst.msk [vmem:[%s3 + $0x30] sm:$0xf] %vm384, %v364
  %398 = vst.msk [vmem:[%s3 + $0x34] sm:$0xf] %vm384, %v365
  %399 = vst.msk [vmem:[%s3 + $0x38] sm:$0xf] %vm384, %v366
  %400 = vst.msk [vmem:[%s3 + $0x3c] sm:$0xf] %vm384, %v367
  // Predicated region
  $region14: #{net_t_forward.3} parent=0 // pred_check
    _
  $region15: #{net_t_forward.3} parent=0 // pred_check_branch
    %402 = sbr.rel (0) target = $region17
  $region16: #{net_t_forward.3} parent=0 // pred_region
    _
  $region17: #{net_t_forward.3} parent=0 // pred_fallthru
    _
  // Predicated region
  $region18: #{net_t_forward.3} parent=0 // pred_check
    _
  $region19: #{net_t_forward.3} parent=0 // pred_check_branch
    %404 = sbr.rel (0) target = $region21
  $region20: #{net_t_forward.3} parent=0 // pred_region
    _
  $region21: #{net_t_forward.3} parent=0 // pred_fallthru
    _

// kernel: net_t_forward.4
$region0: #{net_t_forward.4}
  #allocation0 [shape = 'u32[]', space=smem, size = 0x4, offset = 0x4, fixed_abs, tag = 'smem constant byte address 0x4 - core index']
  #allocation1 [shape = 'u32[144,128]{1,0:T(1,128)}', space=vmem, size = 0x12000, scoped, tag = 'internal scratch']
  %s0 = inlined_call_operand.vmem [shape: bf16[2,10,10,32], index: 0, kind: input, shape index: {}]
  %s1 = inlined_call_operand.vmem [shape: bf16[9,32,32], index: 1, kind: input, shape index: {}]
  %s2 = inlined_call_operand.vmem [shape: f32[1,32], index: 2, kind: input, shape index: {}]
  %s3 = inlined_call_operand.vmem [shape: bf16[2,8,8,32], index: 3, kind: output, shape index: {}]
  %s4 = sld [smem:[#allocation0]]
  $region52: #{net_t_forward.4} parent=0
    _
  %s6 = ssub.s32 1, %s4
  %s7 = scalar_select 0, %s6, %s4
  loop: start=0, step=1, limit=4
  $region2: #{net_t_forward.4} parent=0 // loop_pre_header
    _
  $region3: #{net_t_forward.4} parent=0 // loop_header
    %s9 = sphi 0, %s13
    %p10 = scmp.ge.s32.totalorder %s9, 4
    %s19 = sphi 0, %s21
    %s22 = sphi 0, %s19
    %s23 = sphi 0, %s22
    %s39 = sphi 0, %s23
    %s43 = sphi 0, %s43
    %s45 = sphi 0, %s43
    %s46 = sphi 0, %s45
    %s60 = sphi 0, %s46
    %s64 = sphi 0, %s64
    %s66 = sphi 0, %s64
    %s67 = sphi 0, %s66
    %s81 = sphi 0, %s67
    %s87 = sphi 0, %s89
    %s90 = sphi 0, %s87
    %s91 = sphi 0, %s90
    %s107 = sphi 0, %s91
  $region4: #{net_t_forward.4} parent=0 // loop_header_branch
    %12 = sbr.rel (%p10) target = $region8
  $region5: #{net_t_forward.4} parent=0 // loop_body
    %s14 = ssub.s32 %s9, 1
    %s15 = ssub.s32 %s9, 2
    %s16 = sadd.s32 %s9, 1
    %s17 = ssub.s32 %s9, %s16
    %p18 = scmp.eq.s32.totalorder %s17, 0
    %s20 = sadd.s32 %s19, 1
    %s21 = scalar_select %p18, %s19, %s20
    %p24 = pneg %p18
    %p25 = scmp.eq.s32.totalorder %s9, 1
    %p26 = por %p24, %p25
    %p27 = scmp.ne.s32.totalorder %s19, %s22
    %p28 = scmp.eq.s32.totalorder %s9, 0
    %p29 = por %p27, %p28
    %p30 = scmp.ne.s32.totalorder %s19, %s22
    %p31 = scmp.eq.s32.totalorder %s14, 1
    %p32 = por %p30, %p31
    %p33 = scmp.ne.s32.totalorder %s22, %s23
    %p34 = scmp.eq.s32.totalorder %s14, 0
    %p35 = por %p33, %p34
    %p36 = scmp.ne.s32.totalorder %s22, %s23
    %p37 = scmp.eq.s32.totalorder %s15, 1
    %p38 = por %p36, %p37
    %p40 = scmp.ne.s32.totalorder %s23, %s39
    %p41 = scmp.eq.s32.totalorder %s15, 0
    %p42 = por %p40, %p41
    %s44 = sadd.s32 %s43, 1
    %p47 = scmp.eq.s32.totalorder %s9, 1
    %p48 = scmp.ne.s32.totalorder %s43, %s45
    %p49 = scmp.eq.s32.totalorder %s9, 0
    %p50 = por %p48, %p49
    %p51 = scmp.ne.s32.totalorder %s43, %s45
    %p52 = scmp.eq.s32.totalorder %s14, 1
    %p53 = por %p51, %p52
    %p54 = scmp.ne.s32.totalorder %s45, %s46
    %p55 = scmp.eq.s32.totalorder %s14, 0
    %p56 = por %p54, %p55
    %p57 = scmp.ne.s32.totalorder %s45, %s46
    %p58 = scmp.eq.s32.totalorder %s15, 1
    %p59 = por %p57, %p58
    %p61 = scmp.ne.s32.totalorder %s46, %s60
    %p62 = scmp.eq.s32.totalorder %s15, 0
    %p63 = por %p61, %p62
    %s65 = sadd.s32 %s64, 1
    %p68 = scmp.eq.s32.totalorder %s9, 1
    %p69 = scmp.ne.s32.totalorder %s64, %s66
    %p70 = scmp.eq.s32.totalorder %s9, 0
    %p71 = por %p69, %p70
    %p72 = scmp.ne.s32.totalorder %s64, %s66
    %p73 = scmp.eq.s32.totalorder %s14, 1
    %p74 = por %p72, %p73
    %p75 = scmp.ne.s32.totalorder %s66, %s67
    %p76 = scmp.eq.s32.totalorder %s14, 0
    %p77 = por %p75, %p76
    %p78 = scmp.ne.s32.totalorder %s66, %s67
    %p79 = scmp.eq.s32.totalorder %s15, 1
    %p80 = por %p78, %p79
    %p82 = scmp.ne.s32.totalorder %s67, %s81
    %p83 = scmp.eq.s32.totalorder %s15, 0
    %p84 = por %p82, %p83
    %s85 = ssub.s32 %s9, %s16
    %p86 = scmp.eq.s32.totalorder %s85, 0
    %s88 = sadd.s32 %s87, 1
    %s89 = scalar_select %p86, %s87, %s88
    %p92 = pneg %p86
    %p93 = scmp.eq.s32.totalorder %s9, 1
    %p94 = por %p92, %p93
    %p95 = scmp.ne.s32.totalorder %s87, %s90
    %p96 = scmp.eq.s32.totalorder %s9, 0
    %p97 = por %p95, %p96
    %p98 = scmp.ne.s32.totalorder %s87, %s90
    %p99 = scmp.eq.s32.totalorder %s14, 1
    %p100 = por %p98, %p99
    %p101 = scmp.ne.s32.totalorder %s90, %s91
    %p102 = scmp.eq.s32.totalorder %s14, 0
    %p103 = por %p101, %p102
    %p104 = scmp.ne.s32.totalorder %s90, %s91
    %p105 = scmp.eq.s32.totalorder %s15, 1
    %p106 = por %p104, %p105
    %p108 = scmp.ne.s32.totalorder %s91, %s107
    %p109 = scmp.eq.s32.totalorder %s15, 0
    %p110 = por %p108, %p109
    %p111 = scmp.le.s32.totalorder 1, %s9
    %p112 = scmp.lt.s32.totalorder %s9, 3
    %p113 = pnand %p111, %p112
    %p114 = pneg %p113
    // Predicated region
    $region9: #{net_t_forward.4} parent=5 // pred_check
      _
    $region10: #{net_t_forward.4} parent=5 // pred_check_branch
      %116 = sbr.rel (%p113) target = $region12
    $region11: #{net_t_forward.4} parent=5 // pred_region
      %s117 = ssub.s32 %s9, 1
      // Predicated region
      $region13: #{net_t_forward.4} parent=11 // pred_check
        %p118 = pneg %p56
      $region14: #{net_t_forward.4} parent=11 // pred_check_branch
        %120 = sbr.rel (%p118) target = $region16
      $region15: #{net_t_forward.4} parent=11 // pred_region
        _
      $region16: #{net_t_forward.4} parent=11 // pred_fallthru
        _
      // Predicated region
      $region17: #{net_t_forward.4} parent=11 // pred_check
        %p121 = pneg %p77
      $region18: #{net_t_forward.4} parent=11 // pred_check_branch
        %123 = sbr.rel (%p121) target = $region20
      $region19: #{net_t_forward.4} parent=11 // pred_region
        _
      $region20: #{net_t_forward.4} parent=11 // pred_fallthru
        _
    $region12: #{net_t_forward.4} parent=5 // pred_fallthru
      _
    %p124 = scmp.lt.s32.totalorder %s9, 2
    // Predicated region
    $region21: #{net_t_forward.4} parent=5 // pred_check
      %p125 = pneg %p124
    $region22: #{net_t_forward.4} parent=5 // pred_check_branch
      %127 = sbr.rel (%p125) target = $region24
    $region23: #{net_t_forward.4} parent=5 // pred_region
      // Predicated region
      $region25: #{net_t_forward.4} parent=23 // pred_check
        %p128 = pneg %p29
      $region26: #{net_t_forward.4} parent=23 // pred_check_branch
        %130 = sbr.rel (%p128) target = $region28
      $region27: #{net_t_forward.4} parent=23 // pred_region
        %p131 = scmp.lt.s32.totalorder %s9, 1
        %s132 = scalar_select %p131, %s9, 1
        %s133 = smul.addr %s132, 20
        %s134 = smul.addr %s133, 4
        %s135 = scalar_lea.vmem %s0, %s134
      $region28: #{net_t_forward.4} parent=23 // pred_fallthru
        _
    $region24: #{net_t_forward.4} parent=5 // pred_fallthru
      _
    %p136 = scmp.le.s32.totalorder 1, %s9
    %p137 = scmp.lt.s32.totalorder %s9, 3
    %p138 = pnand %p136, %p137
    %p139 = pneg %p138
    // Predicated region
    $region29: #{net_t_forward.4} parent=5 // pred_check
      _
    $region30: #{net_t_forward.4} parent=5 // pred_check_branch
      %141 = sbr.rel (%p138) target = $region32
    $region31: #{net_t_forward.4} parent=5 // pred_region
      %s142 = ssub.s32 %s9, 1
      %p143 = scmp.lt.s32.totalorder %s14, 1
      %s144 = scalar_select %p143, %s14, 1
      %s145 = smul.addr %s144, 20
      %s146 = smul.addr %s145, 4
      %s147 = scalar_lea.vmem %s0, %s146
      %p148 = pneg %p35
      %p149 = pneg %p32
      %p150 = pneg %p56
      %p151 = pneg %p53
      %p152 = pneg %p77
      %p153 = pneg %p74
      %p154 = pneg %p103
      %p155 = pneg %p100
      %p156 = scmp.lt.s32.totalorder %s14, 1
      %s157 = scalar_select %p156, %s14, 1
      %s158 = smul.addr %s157, 8
      %s159 = smul.addr %s158, 4
      %s160 = scalar_lea.vmem %s3, %s159
      %p161 = scmp.lt.s32.totalorder %s14, 1
      %s162 = scalar_select %p161, %s14, 1
      %s163 = smul.addr %s162, 20
      %s164 = smul.addr %s163, 4
      %s165 = scalar_lea.vmem %s0, %s164
      %p166 = scmp.lt.s32.totalorder %s14, 1
      %s167 = scalar_select %p166, %s14, 1
      %s168 = smul.addr %s167, 8
      %s169 = smul.addr %s168, 4
      %s170 = scalar_lea.vmem %s3, %s169
      %v172 = vld [vmem:[%s2] sm:$0x1]
      loop: start=0, step=1, limit=8
      $region33: #{net_t_forward.4} parent=31 // loop_pre_header
        _
      $region34: #{net_t_forward.4} parent=31 // loop_header
        %s174 = sphi 0, %s178
        %p175 = scmp.ge.s32.totalorder %s174, 8
      $region35: #{net_t_forward.4} parent=31 // loop_header_branch
        %177 = sbr.rel (%p175) target = $region39
      $region36: #{net_t_forward.4} parent=31 // loop_body
        %s179 = smul.u32 %s174, 2
        %s180 = smul.addr %s179, 4
        %s181 = scalar_lea.vmem %s165, %s180
        %v182 = vld [vmem:[%s181] sm:$0xf]
        %v183 = vld [vmem:[%s1] sm:$0xf]
        %v184 = vld [vmem:[%s1 + $0x4] sm:$0xf]
        %v185 = vld [vmem:[%s1 + $0x8] sm:$0xf]
        %v186 = vld [vmem:[%s1 + $0xc] sm:$0xf]
        %v187 = vld [vmem:[%s181 + $0x4] sm:$0x1]
        %s188 = scalar_lea.vmem %s1, 16
        %v189 = vld [vmem:[%s188] sm:$0xf]
        %v190 = vld [vmem:[%s188 + $0x4] sm:$0xf]
        %v191 = vld [vmem:[%s188 + $0x8] sm:$0xf]
        %v192 = vld [vmem:[%s188 + $0xc] sm:$0xf]
        %v195 = vunpack.c.l.b16 %v182
        %v196 = vunpack.c.l.b16 %v187
        %v197 = vpack.c.b16 %v196, %v195
        %v199 = vshrl.u32 %v197, 16
        %v201 = vshll.u32 %v197, 16
        %v203 = vrot.slane %v201, 1
        %v204 = vor.u32 %v199, %v203
        %v209 = vunpack.c.l.b16 %v189
        %v210 = vunpack.c.l.b16 %v190
        %v211 = vunpack.c.l.b16 %v191
        %v212 = vunpack.c.l.b16 %v192
        %v213 = vpack.c.b16 %v210, %v209
        %v214 = vpack.c.b16 %v212, %v211
        %vm217 = vcmask 261120
        %v219 = vsel %vm217, %v204, 0
        %221 = vmatprep.subr.bf16.mxu0 0
        %222 = vmatpush1.bf16.msra.mxu0 0
        %223 = vmatprep.subr.bf16.mxu0 0
        %224 = vmatpush1.bf16.msra.mxu0 0
        %225 = vmatprep.subr.bf16.mxu0 0
        %226 = vmatpush1.bf16.msra.mxu0 0
        %227 = vmatprep.subr.bf16.mxu0 0
        %228 = vmatpush1.bf16.msra.mxu0 0
        %229 = vmatprep.subr.bf16.mxu0 0
        %230 = vmatpush1.bf16.msra.mxu0 0
        %231 = vmatprep.subr.bf16.mxu0 0
        %232 = vmatpush1.bf16.msra.mxu0 0
        %233 = vmatprep.subr.bf16.mxu0 0
        %234 = vmatpush1.bf16.msra.mxu0 %v214
        %235 = vmatprep.subr.bf16.mxu0 0
        %236 = vmatpush1.bf16.msra.mxu0 %v213
        %237 = vmatprep.subr.bf16.mxu0 0
        %238 = vmatpush2.bf16.msra.mxu0 0
        %239 = vmatprep.subr.bf16.mxu0 0
        %240 = vmatpush2.bf16.msra.mxu0 0
        %241 = vmatprep.subr.bf16.mxu0 0
        %242 = vmatpush2.bf16.msra.mxu0 0
        %243 = vmatprep.subr.bf16.mxu0 0
        %244 = vmatpush2.bf16.msra.mxu0 0
        %245 = vmatprep.subr.bf16.mxu0 0
        %246 = vmatpush2.bf16.msra.mxu0 0
        %247 = vmatprep.subr.bf16.mxu0 0
        %248 = vmatpush2.bf16.msra.mxu0 0
        %249 = vmatprep.subr.bf16.mxu0 0
        %250 = vmatpush2.bf16.msra.mxu0 0
        %251 = vmatprep.subr.bf16.mxu0 0
        %252 = vmatpush2.bf16.msra.mxu0 0
        %253 = vmatprep.mubr.bf16.mxu0 0
        %254 = vmatmul.mubr.bf16.gmra.mxu0 %v219
        %v255 = vpop.f32.mrf.mxu0
        %v256 = vadd.f32 0.0, %v255
        %v257 = vpop.f32.mrf.mxu0
        %v258 = vpop.f32.mrf.mxu0
        %v259 = vpop.f32.mrf.mxu0
        %260 = vdwg.mxu0
        %v265 = vunpack.c.l.b16 %v183
        %v266 = vunpack.c.l.b16 %v184
        %v267 = vunpack.c.l.b16 %v185
        %v268 = vunpack.c.l.b16 %v186
        %v269 = vpack.c.b16 %v266, %v265
        %v270 = vpack.c.b16 %v268, %v267
        %v274 = vsel %vm217, %v182, 0
        %276 = vmatprep.subr.bf16.mxu0 0
        %277 = vmatpush1.bf16.msra.mxu0 0
        %278 = vmatprep.subr.bf16.mxu0 0
        %279 = vmatpush1.bf16.msra.mxu0 0
        %280 = vmatprep.subr.bf16.mxu0 0
        %281 = vmatpush1.bf16.msra.mxu0 0
        %282 = vmatprep.subr.bf16.mxu0 0
        %283 = vmatpush1.bf16.msra.mxu0 0
        %284 = vmatprep.subr.bf16.mxu0 0
        %285 = vmatpush1.bf16.msra.mxu0 0
        %286 = vmatprep.subr.bf16.mxu0 0
        %287 = vmatpush1.bf16.msra.mxu0 0
        %288 = vmatprep.subr.bf16.mxu0 0
        %289 = vmatpush1.bf16.msra.mxu0 %v270
        %290 = vmatprep.subr.bf16.mxu0 0
        %291 = vmatpush1.bf16.msra.mxu0 %v269
        %292 = vmatprep.subr.bf16.mxu0 0
        %293 = vmatpush2.bf16.msra.mxu0 0
        %294 = vmatprep.subr.bf16.mxu0 0
        %295 = vmatpush2.bf16.msra.mxu0 0
        %296 = vmatprep.subr.bf16.mxu0 0
        %297 = vmatpush2.bf16.msra.mxu0 0
        %298 = vmatprep.subr.bf16.mxu0 0
        %299 = vmatpush2.bf16.msra.mxu0 0
        %300 = vmatprep.subr.bf16.mxu0 0
        %301 = vmatpush2.bf16.msra.mxu0 0
        %302 = vmatprep.subr.bf16.mxu0 0
        %303 = vmatpush2.bf16.msra.mxu0 0
        %304 = vmatprep.subr.bf16.mxu0 0
        %305 = vmatpush2.bf16.msra.mxu0 0
        %306 = vmatprep.subr.bf16.mxu0 0
        %307 = vmatpush2.bf16.msra.mxu0 0
        %308 = vmatprep.mubr.bf16.mxu0 0
        %309 = vmatmul.mubr.bf16.gmra.mxu0 %v274
        %v310 = vpop.f32.mrf.mxu0
        %v311 = vadd.f32 %v256, %v310
        %v312 = vpop.f32.mrf.mxu0
        %v313 = vpop.f32.mrf.mxu0
        %v314 = vpop.f32.mrf.mxu0
        %315 = vdwg.mxu0
        %v316 = vld [vmem:[%s181] sm:$0xe]
        %s317 = scalar_lea.vmem %s1, 32
        %v318 = vld [vmem:[%s317] sm:$0xf]
        %v319 = vld [vmem:[%s317 + $0x4] sm:$0xf]
        %v320 = vld [vmem:[%s317 + $0x8] sm:$0xf]
        %v321 = vld [vmem:[%s317 + $0xc] sm:$0xf]
        %v323 = vunpack.c.l.b16 %v316
        %v324 = vpack.c.b16 %v196, %v323
        %v325 = vrot.slane %v324, 1
        %v330 = vunpack.c.l.b16 %v318
        %v331 = vunpack.c.l.b16 %v319
        %v332 = vunpack.c.l.b16 %v320
        %v333 = vunpack.c.l.b16 %v321
        %v334 = vpack.c.b16 %v331, %v330
        %v335 = vpack.c.b16 %v333, %v332
        %v339 = vsel %vm217, %v325, 0
        %341 = vmatprep.subr.bf16.mxu0 0
        %342 = vmatpush1.bf16.msra.mxu0 0
        %343 = vmatprep.subr.bf16.mxu0 0
        %344 = vmatpush1.bf16.msra.mxu0 0
        %345 = vmatprep.subr.bf16.mxu0 0
        %346 = vmatpush1.bf16.msra.mxu0 0
        %347 = vmatprep.subr.bf16.mxu0 0
        %348 = vmatpush1.bf16.msra.mxu0 0
        %349 = vmatprep.subr.bf16.mxu0 0
        %350 = vmatpush1.bf16.msra.mxu0 0
        %351 = vmatprep.subr.bf16.mxu0 0
        %352 = vmatpush1.bf16.msra.mxu0 0
        %353 = vmatprep.subr.bf16.mxu0 0
        %354 = vmatpush1.bf16.msra.mxu0 %v335
        %355 = vmatprep.subr.bf16.mxu0 0
        %356 = vmatpush1.bf16.msra.mxu0 %v334
        %357 = vmatprep.subr.bf16.mxu0 0
        %358 = vmatpush2.bf16.msra.mxu0 0
        %359 = vmatprep.subr.bf16.mxu0 0
        %360 = vmatpush2.bf16.msra.mxu0 0
        %361 = vmatprep.subr.bf16.mxu0 0
        %362 = vmatpush2.bf16.msra.mxu0 0
        %363 = vmatprep.subr.bf16.mxu0 0
        %364 = vmatpush2.bf16.msra.mxu0 0
        %365 = vmatprep.subr.bf16.mxu0 0
        %366 = vmatpush2.bf16.msra.mxu0 0
        %367 = vmatprep.subr.bf16.mxu0 0
        %368 = vmatpush2.bf16.msra.mxu0 0
        %369 = vmatprep.subr.bf16.mxu0 0
        %370 = vmatpush2.bf16.msra.mxu0 0
        %371 = vmatprep.subr.bf16.mxu0 0
        %372 = vmatpush2.bf16.msra.mxu0 0
        %373 = vmatprep.mubr.bf16.mxu0 0
        %374 = vmatmul.mubr.bf16.gmra.mxu0 %v339
        %v375 = vpop.f32.mrf.mxu0
        %v376 = vadd.f32 0.0, %v375
        %v377 = vpop.f32.mrf.mxu0
        %v378 = vpop.f32.mrf.mxu0
        %v379 = vpop.f32.mrf.mxu0
        %380 = vdwg.mxu0
        %v381 = vadd.f32 %v311, %v376
        %s382 = sadd.s32 %s174, 1
        %s383 = smul.u32 %s382, 2
        %s384 = smul.addr %s383, 4
        %s385 = scalar_lea.vmem %s165, %s384
        %v386 = vld [vmem:[%s385] sm:$0xf]
        %s387 = scalar_lea.vmem %s1, 48
        %v388 = vld [vmem:[%s387] sm:$0xf]
        %v389 = vld [vmem:[%s387 + $0x4] sm:$0xf]
        %v390 = vld [vmem:[%s387 + $0x8] sm:$0xf]
        %v391 = vld [vmem:[%s387 + $0xc] sm:$0xf]
        %v396 = vunpack.c.l.b16 %v388
        %v397 = vunpack.c.l.b16 %v389
        %v398 = vunpack.c.l.b16 %v390
        %v399 = vunpack.c.l.b16 %v391
        %v400 = vpack.c.b16 %v397, %v396
        %v401 = vpack.c.b16 %v399, %v398
        %v405 = vsel %vm217, %v386, 0
        %407 = vmatprep.subr.bf16.mxu0 0
        %408 = vmatpush1.bf16.msra.mxu0 0
        %409 = vmatprep.subr.bf16.mxu0 0
        %410 = vmatpush1.bf16.msra.mxu0 0
        %411 = vmatprep.subr.bf16.mxu0 0
        %412 = vmatpush1.bf16.msra.mxu0 0
        %413 = vmatprep.subr.bf16.mxu0 0
        %414 = vmatpush1.bf16.msra.mxu0 0
        %415 = vmatprep.subr.bf16.mxu0 0
        %416 = vmatpush1.bf16.msra.mxu0 0
        %417 = vmatprep.subr.bf16.mxu0 0
        %418 = vmatpush1.bf16.msra.mxu0 0
        %419 = vmatprep.subr.bf16.mxu0 0
        %420 = vmatpush1.bf16.msra.mxu0 %v401
        %421 = vmatprep.subr.bf16.mxu0 0
        %422 = vmatpush1.bf16.msra.mxu0 %v400
        %423 = vmatprep.subr.bf16.mxu0 0
        %424 = vmatpush2.bf16.msra.mxu0 0
        %425 = vmatprep.subr.bf16.mxu0 0
        %426 = vmatpush2.bf16.msra.mxu0 0
        %427 = vmatprep.subr.bf16.mxu0 0
        %428 = vmatpush2.bf16.msra.mxu0 0
        %429 = vmatprep.subr.bf16.mxu0 0
        %430 = vmatpush2.bf16.msra.mxu0 0
        %431 = vmatprep.subr.bf16.mxu0 0
        %432 = vmatpush2.bf16.msra.mxu0 0
        %433 = vmatprep.subr.bf16.mxu0 0
        %434 = vmatpush2.bf16.msra.mxu0 0
        %435 = vmatprep.subr.bf16.mxu0 0
        %436 = vmatpush2.bf16.msra.mxu0 0
        %437 = vmatprep.subr.bf16.mxu0 0
        %438 = vmatpush2.bf16.msra.mxu0 0
        %439 = vmatprep.mubr.bf16.mxu0 0
        %440 = vmatmul.mubr.bf16.gmra.mxu0 %v405
        %v441 = vpop.f32.mrf.mxu0
        %v442 = vadd.f32 0.0, %v441
        %v443 = vpop.f32.mrf.mxu0
        %v444 = vpop.f32.mrf.mxu0
        %v445 = vpop.f32.mrf.mxu0
        %446 = vdwg.mxu0
        %v447 = vadd.f32 %v381, %v442
        %v448 = vld [vmem:[%s385] sm:$0xf]
        %v449 = vld [vmem:[%s385 + $0x4] sm:$0x1]
        %s450 = scalar_lea.vmem %s1, 64
        %v451 = vld [vmem:[%s450] sm:$0xf]
        %v452 = vld [vmem:[%s450 + $0x4] sm:$0xf]
        %v453 = vld [vmem:[%s450 + $0x8] sm:$0xf]
        %v454 = vld [vmem:[%s450 + $0xc] sm:$0xf]
        %v457 = vunpack.c.l.b16 %v448
        %v458 = vunpack.c.l.b16 %v449
        %v459 = vpack.c.b16 %v458, %v457
        %v461 = vshrl.u32 %v459, 16
        %v463 = vshll.u32 %v459, 16
        %v465 = vrot.slane %v463, 1
        %v466 = vor.u32 %v461, %v465
        %v471 = vunpack.c.l.b16 %v451
        %v472 = vunpack.c.l.b16 %v452
        %v473 = vunpack.c.l.b16 %v453
        %v474 = vunpack.c.l.b16 %v454
        %v475 = vpack.c.b16 %v472, %v471
        %v476 = vpack.c.b16 %v474, %v473
        %v480 = vsel %vm217, %v466, 0
        %482 = vmatprep.subr.bf16.mxu0 0
        %483 = vmatpush1.bf16.msra.mxu0 0
        %484 = vmatprep.subr.bf16.mxu0 0
        %485 = vmatpush1.bf16.msra.mxu0 0
        %486 = vmatprep.subr.bf16.mxu0 0
        %487 = vmatpush1.bf16.msra.mxu0 0
        %488 = vmatprep.subr.bf16.mxu0 0
        %489 = vmatpush1.bf16.msra.mxu0 0
        %490 = vmatprep.subr.bf16.mxu0 0
        %491 = vmatpush1.bf16.msra.mxu0 0
        %492 = vmatprep.subr.bf16.mxu0 0
        %493 = vmatpush1.bf16.msra.mxu0 0
        %494 = vmatprep.subr.bf16.mxu0 0
        %495 = vmatpush1.bf16.msra.mxu0 %v476
        %496 = vmatprep.subr.bf16.mxu0 0
        %497 = vmatpush1.bf16.msra.mxu0 %v475
        %498 = vmatprep.subr.bf16.mxu0 0
        %499 = vmatpush2.bf16.msra.mxu0 0
        %500 = vmatprep.subr.bf16.mxu0 0
        %501 = vmatpush2.bf16.msra.mxu0 0
        %502 = vmatprep.subr.bf16.mxu0 0
        %503 = vmatpush2.bf16.msra.mxu0 0
        %504 = vmatprep.subr.bf16.mxu0 0
        %505 = vmatpush2.bf16.msra.mxu0 0
        %506 = vmatprep.subr.bf16.mxu0 0
        %507 = vmatpush2.bf16.msra.mxu0 0
        %508 = vmatprep.subr.bf16.mxu0 0
        %509 = vmatpush2.bf16.msra.mxu0 0
        %510 = vmatprep.subr.bf16.mxu0 0
        %511 = vmatpush2.bf16.msra.mxu0 0
        %512 = vmatprep.subr.bf16.mxu0 0
        %513 = vmatpush2.bf16.msra.mxu0 0
        %514 = vmatprep.mubr.bf16.mxu0 0
        %515 = vmatmul.mubr.bf16.gmra.mxu0 %v480
        %v516 = vpop.f32.mrf.mxu0
        %v517 = vadd.f32 0.0, %v516
        %v518 = vpop.f32.mrf.mxu0
        %v519 = vpop.f32.mrf.mxu0
        %v520 = vpop.f32.mrf.mxu0
        %521 = vdwg.mxu0
        %v522 = vadd.f32 %v447, %v517
        %v523 = vld [vmem:[%s385] sm:$0xe]
        %s524 = scalar_lea.vmem %s1, 80
        %v525 = vld [vmem:[%s524] sm:$0xf]
        %v526 = vld [vmem:[%s524 + $0x4] sm:$0xf]
        %v527 = vld [vmem:[%s524 + $0x8] sm:$0xf]
        %v528 = vld [vmem:[%s524 + $0xc] sm:$0xf]
        %v530 = vunpack.c.l.b16 %v523
        %v531 = vpack.c.b16 %v458, %v530
        %v532 = vrot.slane %v531, 1
        %v537 = vunpack.c.l.b16 %v525
        %v538 = vunpack.c.l.b16 %v526
        %v539 = vunpack.c.l.b16 %v527
        %v540 = vunpack.c.l.b16 %v528
        %v541 = vpack.c.b16 %v538, %v537
        %v542 = vpack.c.b16 %v540, %v539
        %v546 = vsel %vm217, %v532, 0
        %548 = vmatprep.subr.bf16.mxu0 0
        %549 = vmatpush1.bf16.msra.mxu0 0
        %550 = vmatprep.subr.bf16.mxu0 0
        %551 = vmatpush1.bf16.msra.mxu0 0
        %552 = vmatprep.subr.bf16.mxu0 0
        %553 = vmatpush1.bf16.msra.mxu0 0
        %554 = vmatprep.subr.bf16.mxu0 0
        %555 = vmatpush1.bf16.msra.mxu0 0
        %556 = vmatprep.subr.bf16.mxu0 0
        %557 = vmatpush1.bf16.msra.mxu0 0
        %558 = vmatprep.subr.bf16.mxu0 0
        %559 = vmatpush1.bf16.msra.mxu0 0
        %560 = vmatprep.subr.bf16.mxu0 0
        %561 = vmatpush1.bf16.msra.mxu0 %v542
        %562 = vmatprep.subr.bf16.mxu0 0
        %563 = vmatpush1.bf16.msra.mxu0 %v541
        %564 = vmatprep.subr.bf16.mxu0 0
        %565 = vmatpush2.bf16.msra.mxu0 0
        %566 = vmatprep.subr.bf16.mxu0 0
        %567 = vmatpush2.bf16.msra.mxu0 0
        %568 = vmatprep.subr.bf16.mxu0 0
        %569 = vmatpush2.bf16.msra.mxu0 0
        %570 = vmatprep.subr.bf16.mxu0 0
        %571 = vmatpush2.bf16.msra.mxu0 0
        %572 = vmatprep.subr.bf16.mxu0 0
        %573 = vmatpush2.bf16.msra.mxu0 0
        %574 = vmatprep.subr.bf16.mxu0 0
        %575 = vmatpush2.bf16.msra.mxu0 0
        %576 = vmatprep.subr.bf16.mxu0 0
        %577 = vmatpush2.bf16.msra.mxu0 0
        %578 = vmatprep.subr.bf16.mxu0 0
        %579 = vmatpush2.bf16.msra.mxu0 0
        %580 = vmatprep.mubr.bf16.mxu0 0
        %581 = vmatmul.mubr.bf16.gmra.mxu0 %v546
        %v582 = vpop.f32.mrf.mxu0
        %v583 = vadd.f32 0.0, %v582
        %v584 = vpop.f32.mrf.mxu0
        %v585 = vpop.f32.mrf.mxu0
        %v586 = vpop.f32.mrf.mxu0
        %587 = vdwg.mxu0
        %v588 = vadd.f32 %v522, %v583
        %s589 = sadd.s32 %s174, 2
        %s590 = smul.u32 %s589, 2
        %s591 = smul.addr %s590, 4
        %s592 = scalar_lea.vmem %s165, %s591
        %v593 = vld [vmem:[%s592] sm:$0xf]
        %s594 = scalar_lea.vmem %s1, 96
        %v595 = vld [vmem:[%s594] sm:$0xf]
        %v596 = vld [vmem:[%s594 + $0x4] sm:$0xf]
        %v597 = vld [vmem:[%s594 + $0x8] sm:$0xf]
        %v598 = vld [vmem:[%s594 + $0xc] sm:$0xf]
        %v603 = vunpack.c.l.b16 %v595
        %v604 = vunpack.c.l.b16 %v596
        %v605 = vunpack.c.l.b16 %v597
        %v606 = vunpack.c.l.b16 %v598
        %v607 = vpack.c.b16 %v604, %v603
        %v608 = vpack.c.b16 %v606, %v605
        %v612 = vsel %vm217, %v593, 0
        %614 = vmatprep.subr.bf16.mxu0 0
        %615 = vmatpush1.bf16.msra.mxu0 0
        %616 = vmatprep.subr.bf16.mxu0 0
        %617 = vmatpush1.bf16.msra.mxu0 0
        %618 = vmatprep.subr.bf16.mxu0 0
        %619 = vmatpush1.bf16.msra.mxu0 0
        %620 = vmatprep.subr.bf16.mxu0 0
        %621 = vmatpush1.bf16.msra.mxu0 0
        %622 = vmatprep.subr.bf16.mxu0 0
        %623 = vmatpush1.bf16.msra.mxu0 0
        %624 = vmatprep.subr.bf16.mxu0 0
        %625 = vmatpush1.bf16.msra.mxu0 0
        %626 = vmatprep.subr.bf16.mxu0 0
        %627 = vmatpush1.bf16.msra.mxu0 %v608
        %628 = vmatprep.subr.bf16.mxu0 0
        %629 = vmatpush1.bf16.msra.mxu0 %v607
        %630 = vmatprep.subr.bf16.mxu0 0
        %631 = vmatpush2.bf16.msra.mxu0 0
        %632 = vmatprep.subr.bf16.mxu0 0
        %633 = vmatpush2.bf16.msra.mxu0 0
        %634 = vmatprep.subr.bf16.mxu0 0
        %635 = vmatpush2.bf16.msra.mxu0 0
        %636 = vmatprep.subr.bf16.mxu0 0
        %637 = vmatpush2.bf16.msra.mxu0 0
        %638 = vmatprep.subr.bf16.mxu0 0
        %639 = vmatpush2.bf16.msra.mxu0 0
        %640 = vmatprep.subr.bf16.mxu0 0
        %641 = vmatpush2.bf16.msra.mxu0 0
        %642 = vmatprep.subr.bf16.mxu0 0
        %643 = vmatpush2.bf16.msra.mxu0 0
        %644 = vmatprep.subr.bf16.mxu0 0
        %645 = vmatpush2.bf16.msra.mxu0 0
        %646 = vmatprep.mubr.bf16.mxu0 0
        %647 = vmatmul.mubr.bf16.gmra.mxu0 %v612
        %v648 = vpop.f32.mrf.mxu0
        %v649 = vadd.f32 0.0, %v648
        %v650 = vpop.f32.mrf.mxu0
        %v651 = vpop.f32.mrf.mxu0
        %v652 = vpop.f32.mrf.mxu0
        %653 = vdwg.mxu0
        %v654 = vadd.f32 %v588, %v649
        %v655 = vld [vmem:[%s592] sm:$0xf]
        %v656 = vld [vmem:[%s592 + $0x4] sm:$0x1]
        %s657 = scalar_lea.vmem %s1, 112
        %v658 = vld [vmem:[%s657] sm:$0xf]
        %v659 = vld [vmem:[%s657 + $0x4] sm:$0xf]
        %v660 = vld [vmem:[%s657 + $0x8] sm:$0xf]
        %v661 = vld [vmem:[%s657 + $0xc] sm:$0xf]
        %v664 = vunpack.c.l.b16 %v655
        %v665 = vunpack.c.l.b16 %v656
        %v666 = vpack.c.b16 %v665, %v664
        %v668 = vshrl.u32 %v666, 16
        %v670 = vshll.u32 %v666, 16
        %v672 = vrot.slane %v670, 1
        %v673 = vor.u32 %v668, %v672
        %v678 = vunpack.c.l.b16 %v658
        %v679 = vunpack.c.l.b16 %v659
        %v680 = vunpack.c.l.b16 %v660
        %v681 = vunpack.c.l.b16 %v661
        %v682 = vpack.c.b16 %v679, %v678
        %v683 = vpack.c.b16 %v681, %v680
        %v687 = vsel %vm217, %v673, 0
        %689 = vmatprep.subr.bf16.mxu0 0
        %690 = vmatpush1.bf16.msra.mxu0 0
        %691 = vmatprep.subr.bf16.mxu0 0
        %692 = vmatpush1.bf16.msra.mxu0 0
        %693 = vmatprep.subr.bf16.mxu0 0
        %694 = vmatpush1.bf16.msra.mxu0 0
        %695 = vmatprep.subr.bf16.mxu0 0
        %696 = vmatpush1.bf16.msra.mxu0 0
        %697 = vmatprep.subr.bf16.mxu0 0
        %698 = vmatpush1.bf16.msra.mxu0 0
        %699 = vmatprep.subr.bf16.mxu0 0
        %700 = vmatpush1.bf16.msra.mxu0 0
        %701 = vmatprep.subr.bf16.mxu0 0
        %702 = vmatpush1.bf16.msra.mxu0 %v683
        %703 = vmatprep.subr.bf16.mxu0 0
        %704 = vmatpush1.bf16.msra.mxu0 %v682
        %705 = vmatprep.subr.bf16.mxu0 0
        %706 = vmatpush2.bf16.msra.mxu0 0
        %707 = vmatprep.subr.bf16.mxu0 0
        %708 = vmatpush2.bf16.msra.mxu0 0
        %709 = vmatprep.subr.bf16.mxu0 0
        %710 = vmatpush2.bf16.msra.mxu0 0
        %711 = vmatprep.subr.bf16.mxu0 0
        %712 = vmatpush2.bf16.msra.mxu0 0
        %713 = vmatprep.subr.bf16.mxu0 0
        %714 = vmatpush2.bf16.msra.mxu0 0
        %715 = vmatprep.subr.bf16.mxu0 0
        %716 = vmatpush2.bf16.msra.mxu0 0
        %717 = vmatprep.subr.bf16.mxu0 0
        %718 = vmatpush2.bf16.msra.mxu0 0
        %719 = vmatprep.subr.bf16.mxu0 0
        %720 = vmatpush2.bf16.msra.mxu0 0
        %721 = vmatprep.mubr.bf16.mxu0 0
        %722 = vmatmul.mubr.bf16.gmra.mxu0 %v687
        %v723 = vpop.f32.mrf.mxu0
        %v724 = vadd.f32 0.0, %v723
        %v725 = vpop.f32.mrf.mxu0
        %v726 = vpop.f32.mrf.mxu0
        %v727 = vpop.f32.mrf.mxu0
        %728 = vdwg.mxu0
        %v729 = vadd.f32 %v654, %v724
        %v730 = vld [vmem:[%s592] sm:$0xe]
        %s731 = scalar_lea.vmem %s1, 128
        %v732 = vld [vmem:[%s731] sm:$0xf]
        %v733 = vld [vmem:[%s731 + $0x4] sm:$0xf]
        %v734 = vld [vmem:[%s731 + $0x8] sm:$0xf]
        %v735 = vld [vmem:[%s731 + $0xc] sm:$0xf]
        %v737 = vunpack.c.l.b16 %v730
        %v738 = vpack.c.b16 %v665, %v737
        %v739 = vrot.slane %v738, 1
        %v744 = vunpack.c.l.b16 %v732
        %v745 = vunpack.c.l.b16 %v733
        %v746 = vunpack.c.l.b16 %v734
        %v747 = vunpack.c.l.b16 %v735
        %v748 = vpack.c.b16 %v745, %v744
        %v749 = vpack.c.b16 %v747, %v746
        %v753 = vsel %vm217, %v739, 0
        %755 = vmatprep.subr.bf16.mxu0 0
        %756 = vmatpush1.bf16.msra.mxu0 0
        %757 = vmatprep.subr.bf16.mxu0 0
        %758 = vmatpush1.bf16.msra.mxu0 0
        %759 = vmatprep.subr.bf16.mxu0 0
        %760 = vmatpush1.bf16.msra.mxu0 0
        %761 = vmatprep.subr.bf16.mxu0 0
        %762 = vmatpush1.bf16.msra.mxu0 0
        %763 = vmatprep.subr.bf16.mxu0 0
        %764 = vmatpush1.bf16.msra.mxu0 0
        %765 = vmatprep.subr.bf16.mxu0 0
        %766 = vmatpush1.bf16.msra.mxu0 0
        %767 = vmatprep.subr.bf16.mxu0 0
        %768 = vmatpush1.bf16.msra.mxu0 %v749
        %769 = vmatprep.subr.bf16.mxu0 0
        %770 = vmatpush1.bf16.msra.mxu0 %v748
        %771 = vmatprep.subr.bf16.mxu0 0
        %772 = vmatpush2.bf16.msra.mxu0 0
        %773 = vmatprep.subr.bf16.mxu0 0
        %774 = vmatpush2.bf16.msra.mxu0 0
        %775 = vmatprep.subr.bf16.mxu0 0
        %776 = vmatpush2.bf16.msra.mxu0 0
        %777 = vmatprep.subr.bf16.mxu0 0
        %778 = vmatpush2.bf16.msra.mxu0 0
        %779 = vmatprep.subr.bf16.mxu0 0
        %780 = vmatpush2.bf16.msra.mxu0 0
        %781 = vmatprep.subr.bf16.mxu0 0
        %782 = vmatpush2.bf16.msra.mxu0 0
        %783 = vmatprep.subr.bf16.mxu0 0
        %784 = vmatpush2.bf16.msra.mxu0 0
        %785 = vmatprep.subr.bf16.mxu0 0
        %786 = vmatpush2.bf16.msra.mxu0 0
        %787 = vmatprep.mubr.bf16.mxu0 0
        %788 = vmatmul.mubr.bf16.gmra.mxu0 %v753
        %v789 = vpop.f32.mrf.mxu0
        %v790 = vadd.f32 0.0, %v789
        %v791 = vpop.f32.mrf.mxu0
        %v792 = vpop.f32.mrf.mxu0
        %v793 = vpop.f32.mrf.mxu0
        %794 = vdwg.mxu0
        %v795 = vadd.f32 %v729, %v790
        %v797 = vlaneseq
        %v798 = vshrl.u32 %v797, 7
        %v799 = vsub.s32 0, %v798
        %v800 = vrot.slane %v172, %v799
        %v802 = vadd.f32 %v795, %v800
        %v803 = vmax.f32 %v802, 0.0
        %v804 = vpack.c.bf16 %v803, %v803
        %s805 = smul.addr %s174, 4
        %s806 = scalar_lea.vmem %s170, %s805
        %vm807 = vcmask 257024
        %808 = vst.msk [vmem:[%s806] sm:$0xf] %vm807, %v804
      $region37: #{net_t_forward.4} parent=31 // loop_footer
        %s178 = sadd.s32 1, %s174
      $region38: #{net_t_forward.4} parent=31 // loop_footer_branch
        %173 = sbr.rel target = $region34
      $region39: #{net_t_forward.4} parent=31 // loop_exit
        _
      %p809 = scmp.lt.s32.totalorder %s14, 1
      %s810 = scalar_select %p809, %s14, 1
      %s811 = smul.addr %s810, 8
      %s812 = smul.addr %s811, 4
      %s813 = scalar_lea.vmem %s3, %s812
      // Predicated region
      $region40: #{net_t_forward.4} parent=31 // pred_check
        %p814 = pneg %p100
      $region41: #{net_t_forward.4} parent=31 // pred_check_branch
        %816 = sbr.rel (%p814) target = $region43
      $region42: #{net_t_forward.4} parent=31 // pred_region
        _
      $region43: #{net_t_forward.4} parent=31 // pred_fallthru
        _
    $region32: #{net_t_forward.4} parent=5 // pred_fallthru
      _
    %p817 = scmp.le.s32.totalorder 2, %s9
    // Predicated region
    $region44: #{net_t_forward.4} parent=5 // pred_check
      %p818 = pneg %p817
    $region45: #{net_t_forward.4} parent=5 // pred_check_branch
      %820 = sbr.rel (%p818) target = $region47
    $region46: #{net_t_forward.4} parent=5 // pred_region
      %s821 = ssub.s32 %s9, 2
      // Predicated region
      $region48: #{net_t_forward.4} parent=46 // pred_check
        %p822 = pneg %p106
      $region49: #{net_t_forward.4} parent=46 // pred_check_branch
        %824 = sbr.rel (%p822) target = $region51
      $region50: #{net_t_forward.4} parent=46 // pred_region
        %p825 = scmp.lt.s32.totalorder %s15, 1
        %s826 = scalar_select %p825, %s15, 1
        %s827 = smul.addr %s826, 8
        %s828 = smul.addr %s827, 4
        %s829 = scalar_lea.vmem %s3, %s828
      $region51: #{net_t_forward.4} parent=46 // pred_fallthru
        _
    $region47: #{net_t_forward.4} parent=5 // pred_fallthru
      _
  $region6: #{net_t_forward.4} parent=0 // loop_footer
    %s13 = sadd.s32 1, %s9
  $region7: #{net_t_forward.4} parent=0 // loop_footer_branch
    %8 = sbr.rel target = $region3
  $region8: #{net_t_forward.4} parent=0 // loop_exit
    _

// kernel: net_t_forward.5
$region0: #{net_t_forward.5}
  #allocation0 [shape = 'u32[]', space=smem, size = 0x4, offset = 0x4, fixed_abs, tag = 'smem constant byte address 0x4 - core index']
  #allocation1 [shape = 'u32[144,128]{1,0:T(1,128)}', space=vmem, size = 0x12000, scoped, tag = 'internal scratch']
  %s0 = inlined_call_operand.vmem [shape: bf16[2,10,10,64], index: 0, kind: input, shape index: {}]
  %s1 = inlined_call_operand.vmem [shape: bf16[9,64,32], index: 1, kind: input, shape index: {}]
  %s2 = inlined_call_operand.vmem [shape: f32[1,32], index: 2, kind: input, shape index: {}]
  %s3 = inlined_call_operand.vmem [shape: bf16[2,8,8,32], index: 3, kind: output, shape index: {}]
  %s4 = sld [smem:[#allocation0]]
  $region52: #{net_t_forward.5} parent=0
    _
  %s6 = ssub.s32 1, %s4
  %s7 = scalar_select 0, %s6, %s4
  loop: start=0, step=1, limit=4
  $region2: #{net_t_forward.5} parent=0 // loop_pre_header
    _
  $region3: #{net_t_forward.5} parent=0 // loop_header
    %s9 = sphi 0, %s13
    %p10 = scmp.ge.s32.totalorder %s9, 4
    %s19 = sphi 0, %s21
    %s22 = sphi 0, %s19
    %s23 = sphi 0, %s22
    %s39 = sphi 0, %s23
    %s43 = sphi 0, %s43
    %s45 = sphi 0, %s43
    %s46 = sphi 0, %s45
    %s60 = sphi 0, %s46
    %s64 = sphi 0, %s64
    %s66 = sphi 0, %s64
    %s67 = sphi 0, %s66
    %s81 = sphi 0, %s67
    %s87 = sphi 0, %s89
    %s90 = sphi 0, %s87
    %s91 = sphi 0, %s90
    %s107 = sphi 0, %s91
  $region4: #{net_t_forward.5} parent=0 // loop_header_branch
    %12 = sbr.rel (%p10) target = $region8
  $region5: #{net_t_forward.5} parent=0 // loop_body
    %s14 = ssub.s32 %s9, 1
    %s15 = ssub.s32 %s9, 2
    %s16 = sadd.s32 %s9, 1
    %s17 = ssub.s32 %s9, %s16
    %p18 = scmp.eq.s32.totalorder %s17, 0
    %s20 = sadd.s32 %s19, 1
    %s21 = scalar_select %p18, %s19, %s20
    %p24 = pneg %p18
    %p25 = scmp.eq.s32.totalorder %s9, 1
    %p26 = por %p24, %p25
    %p27 = scmp.ne.s32.totalorder %s19, %s22
    %p28 = scmp.eq.s32.totalorder %s9, 0
    %p29 = por %p27, %p28
    %p30 = scmp.ne.s32.totalorder %s19, %s22
    %p31 = scmp.eq.s32.totalorder %s14, 1
    %p32 = por %p30, %p31
    %p33 = scmp.ne.s32.totalorder %s22, %s23
    %p34 = scmp.eq.s32.totalorder %s14, 0
    %p35 = por %p33, %p34
    %p36 = scmp.ne.s32.totalorder %s22, %s23
    %p37 = scmp.eq.s32.totalorder %s15, 1
    %p38 = por %p36, %p37
    %p40 = scmp.ne.s32.totalorder %s23, %s39
    %p41 = scmp.eq.s32.totalorder %s15, 0
    %p42 = por %p40, %p41
    %s44 = sadd.s32 %s43, 1
    %p47 = scmp.eq.s32.totalorder %s9, 1
    %p48 = scmp.ne.s32.totalorder %s43, %s45
    %p49 = scmp.eq.s32.totalorder %s9, 0
    %p50 = por %p48, %p49
    %p51 = scmp.ne.s32.totalorder %s43, %s45
    %p52 = scmp.eq.s32.totalorder %s14, 1
    %p53 = por %p51, %p52
    %p54 = scmp.ne.s32.totalorder %s45, %s46
    %p55 = scmp.eq.s32.totalorder %s14, 0
    %p56 = por %p54, %p55
    %p57 = scmp.ne.s32.totalorder %s45, %s46
    %p58 = scmp.eq.s32.totalorder %s15, 1
    %p59 = por %p57, %p58
    %p61 = scmp.ne.s32.totalorder %s46, %s60
    %p62 = scmp.eq.s32.totalorder %s15, 0
    %p63 = por %p61, %p62
    %s65 = sadd.s32 %s64, 1
    %p68 = scmp.eq.s32.totalorder %s9, 1
    %p69 = scmp.ne.s32.totalorder %s64, %s66
    %p70 = scmp.eq.s32.totalorder %s9, 0
    %p71 = por %p69, %p70
    %p72 = scmp.ne.s32.totalorder %s64, %s66
    %p73 = scmp.eq.s32.totalorder %s14, 1
    %p74 = por %p72, %p73
    %p75 = scmp.ne.s32.totalorder %s66, %s67
    %p76 = scmp.eq.s32.totalorder %s14, 0
    %p77 = por %p75, %p76
    %p78 = scmp.ne.s32.totalorder %s66, %s67
    %p79 = scmp.eq.s32.totalorder %s15, 1
    %p80 = por %p78, %p79
    %p82 = scmp.ne.s32.totalorder %s67, %s81
    %p83 = scmp.eq.s32.totalorder %s15, 0
    %p84 = por %p82, %p83
    %s85 = ssub.s32 %s9, %s16
    %p86 = scmp.eq.s32.totalorder %s85, 0
    %s88 = sadd.s32 %s87, 1
    %s89 = scalar_select %p86, %s87, %s88
    %p92 = pneg %p86
    %p93 = scmp.eq.s32.totalorder %s9, 1
    %p94 = por %p92, %p93
    %p95 = scmp.ne.s32.totalorder %s87, %s90
    %p96 = scmp.eq.s32.totalorder %s9, 0
    %p97 = por %p95, %p96
    %p98 = scmp.ne.s32.totalorder %s87, %s90
    %p99 = scmp.eq.s32.totalorder %s14, 1
    %p100 = por %p98, %p99
    %p101 = scmp.ne.s32.totalorder %s90, %s91
    %p102 = scmp.eq.s32.totalorder %s14, 0
    %p103 = por %p101, %p102
    %p104 = scmp.ne.s32.totalorder %s90, %s91
    %p105 = scmp.eq.s32.totalorder %s15, 1
    %p106 = por %p104, %p105
    %p108 = scmp.ne.s32.totalorder %s91, %s107
    %p109 = scmp.eq.s32.totalorder %s15, 0
    %p110 = por %p108, %p109
    %p111 = scmp.le.s32.totalorder 1, %s9
    %p112 = scmp.lt.s32.totalorder %s9, 3
    %p113 = pnand %p111, %p112
    %p114 = pneg %p113
    // Predicated region
    $region9: #{net_t_forward.5} parent=5 // pred_check
      _
    $region10: #{net_t_forward.5} parent=5 // pred_check_branch
      %116 = sbr.rel (%p113) target = $region12
    $region11: #{net_t_forward.5} parent=5 // pred_region
      %s117 = ssub.s32 %s9, 1
      // Predicated region
      $region13: #{net_t_forward.5} parent=11 // pred_check
        %p118 = pneg %p56
      $region14: #{net_t_forward.5} parent=11 // pred_check_branch
        %120 = sbr.rel (%p118) target = $region16
      $region15: #{net_t_forward.5} parent=11 // pred_region
        _
      $region16: #{net_t_forward.5} parent=11 // pred_fallthru
        _
      // Predicated region
      $region17: #{net_t_forward.5} parent=11 // pred_check
        %p121 = pneg %p77
      $region18: #{net_t_forward.5} parent=11 // pred_check_branch
        %123 = sbr.rel (%p121) target = $region20
      $region19: #{net_t_forward.5} parent=11 // pred_region
        _
      $region20: #{net_t_forward.5} parent=11 // pred_fallthru
        _
    $region12: #{net_t_forward.5} parent=5 // pred_fallthru
      _
    %p124 = scmp.lt.s32.totalorder %s9, 2
    // Predicated region
    $region21: #{net_t_forward.5} parent=5 // pred_check
      %p125 = pneg %p124
    $region22: #{net_t_forward.5} parent=5 // pred_check_branch
      %127 = sbr.rel (%p125) target = $region24
    $region23: #{net_t_forward.5} parent=5 // pred_region
      // Predicated region
      $region25: #{net_t_forward.5} parent=23 // pred_check
        %p128 = pneg %p29
      $region26: #{net_t_forward.5} parent=23 // pred_check_branch
        %130 = sbr.rel (%p128) target = $region28
      $region27: #{net_t_forward.5} parent=23 // pred_region
        %p131 = scmp.lt.s32.totalorder %s9, 1
        %s132 = scalar_select %p131, %s9, 1
        %s133 = smul.addr %s132, 20
        %s134 = smul.addr %s133, 4
        %s135 = scalar_lea.vmem %s0, %s134
      $region28: #{net_t_forward.5} parent=23 // pred_fallthru
        _
    $region24: #{net_t_forward.5} parent=5 // pred_fallthru
      _
    %p136 = scmp.le.s32.totalorder 1, %s9
    %p137 = scmp.lt.s32.totalorder %s9, 3
    %p138 = pnand %p136, %p137
    %p139 = pneg %p138
    // Predicated region
    $region29: #{net_t_forward.5} parent=5 // pred_check
      _
    $region30: #{net_t_forward.5} parent=5 // pred_check_branch
      %141 = sbr.rel (%p138) target = $region32
    $region31: #{net_t_forward.5} parent=5 // pred_region
      %s142 = ssub.s32 %s9, 1
      %p143 = scmp.lt.s32.totalorder %s14, 1
      %s144 = scalar_select %p143, %s14, 1
      %s145 = smul.addr %s144, 20
      %s146 = smul.addr %s145, 4
      %s147 = scalar_lea.vmem %s0, %s146
      %p148 = pneg %p35
      %p149 = pneg %p32
      %p150 = pneg %p56
      %p151 = pneg %p53
      %p152 = pneg %p77
      %p153 = pneg %p74
      %p154 = pneg %p103
      %p155 = pneg %p100
      %p156 = scmp.lt.s32.totalorder %s14, 1
      %s157 = scalar_select %p156, %s14, 1
      %s158 = smul.addr %s157, 8
      %s159 = smul.addr %s158, 4
      %s160 = scalar_lea.vmem %s3, %s159
      %p161 = scmp.lt.s32.totalorder %s14, 1
      %s162 = scalar_select %p161, %s14, 1
      %s163 = smul.addr %s162, 20
      %s164 = smul.addr %s163, 4
      %s165 = scalar_lea.vmem %s0, %s164
      %p166 = scmp.lt.s32.totalorder %s14, 1
      %s167 = scalar_select %p166, %s14, 1
      %s168 = smul.addr %s167, 8
      %s169 = smul.addr %s168, 4
      %s170 = scalar_lea.vmem %s3, %s169
      %v172 = vld [vmem:[%s2] sm:$0x1]
      loop: start=0, step=1, limit=8
      $region33: #{net_t_forward.5} parent=31 // loop_pre_header
        _
      $region34: #{net_t_forward.5} parent=31 // loop_header
        %s174 = sphi 0, %s178
        %p175 = scmp.ge.s32.totalorder %s174, 8
      $region35: #{net_t_forward.5} parent=31 // loop_header_branch
        %177 = sbr.rel (%p175) target = $region39
      $region36: #{net_t_forward.5} parent=31 // loop_body
        %s179 = smul.u32 %s174, 2
        %s180 = smul.addr %s179, 4
        %s181 = scalar_lea.vmem %s165, %s180
        %v182 = vld [vmem:[%s181] sm:$0xf]
        %v183 = vld [vmem:[%s1] sm:$0xf]
        %v184 = vld [vmem:[%s1 + $0x4] sm:$0xf]
        %v185 = vld [vmem:[%s1 + $0x8] sm:$0xf]
        %v186 = vld [vmem:[%s1 + $0xc] sm:$0xf]
        %v187 = vld [vmem:[%s1 + $0x10] sm:$0xf]
        %v188 = vld [vmem:[%s1 + $0x14] sm:$0xf]
        %v189 = vld [vmem:[%s1 + $0x18] sm:$0xf]
        %v190 = vld [vmem:[%s1 + $0x1c] sm:$0xf]
        %v191 = vld [vmem:[%s181 + $0x4] sm:$0x1]
        %s192 = scalar_lea.vmem %s1, 32
        %v193 = vld [vmem:[%s192] sm:$0xf]
        %v194 = vld [vmem:[%s192 + $0x4] sm:$0xf]
        %v195 = vld [vmem:[%s192 + $0x8] sm:$0xf]
        %v196 = vld [vmem:[%s192 + $0xc] sm:$0xf]
        %v197 = vld [vmem:[%s192 + $0x10] sm:$0xf]
        %v198 = vld [vmem:[%s192 + $0x14] sm:$0xf]
        %v199 = vld [vmem:[%s192 + $0x18] sm:$0xf]
        %v200 = vld [vmem:[%s192 + $0x1c] sm:$0xf]
        %v203 = vunpack.c.l.b16 %v182
        %v204 = vunpack.c.l.b16 %v191
        %v205 = vpack.c.b16 %v204, %v203
        %v207 = vshrl.u32 %v205, 16
        %v209 = vshll.u32 %v205, 16
        %v211 = vrot.slane %v209, 1
        %v212 = vor.u32 %v207, %v211
        %v221 = vunpack.c.l.b16 %v193
        %v222 = vunpack.c.l.b16 %v194
        %v223 = vunpack.c.l.b16 %v195
        %v224 = vunpack.c.l.b16 %v196
        %v225 = vunpack.c.l.b16 %v197
        %v226 = vunpack.c.l.b16 %v198
        %v227 = vunpack.c.l.b16 %v199
        %v228 = vunpack.c.l.b16 %v200
        %v229 = vpack.c.b16 %v222, %v221
        %v230 = vpack.c.b16 %v224, %v223
        %v231 = vpack.c.b16 %v226, %v225
        %v232 = vpack.c.b16 %v228, %v227
        %vm237 = vcmask 523264
        %v239 = vsel %vm237, %v212, 0
        %241 = vmatprep.subr.bf16.mxu0 0
        %242 = vmatpush1.bf16.msra.mxu0 0
        %243 = vmatprep.subr.bf16.mxu0 0
        %244 = vmatpush1.bf16.msra.mxu0 0
        %245 = vmatprep.subr.bf16.mxu0 0
        %246 = vmatpush1.bf16.msra.mxu0 0
        %247 = vmatprep.subr.bf16.mxu0 0
        %248 = vmatpush1.bf16.msra.mxu0 0
        %249 = vmatprep.subr.bf16.mxu0 0
        %250 = vmatpush1.bf16.msra.mxu0 %v232
        %251 = vmatprep.subr.bf16.mxu0 0
        %252 = vmatpush1.bf16.msra.mxu0 %v231
        %253 = vmatprep.subr.bf16.mxu0 0
        %254 = vmatpush1.bf16.msra.mxu0 %v230
        %255 = vmatprep.subr.bf16.mxu0 0
        %256 = vmatpush1.bf16.msra.mxu0 %v229
        %257 = vmatprep.subr.bf16.mxu0 0
        %258 = vmatpush2.bf16.msra.mxu0 0
        %259 = vmatprep.subr.bf16.mxu0 0
        %260 = vmatpush2.bf16.msra.mxu0 0
        %261 = vmatprep.subr.bf16.mxu0 0
        %262 = vmatpush2.bf16.msra.mxu0 0
        %263 = vmatprep.subr.bf16.mxu0 0
        %264 = vmatpush2.bf16.msra.mxu0 0
        %265 = vmatprep.subr.bf16.mxu0 0
        %266 = vmatpush2.bf16.msra.mxu0 0
        %267 = vmatprep.subr.bf16.mxu0 0
        %268 = vmatpush2.bf16.msra.mxu0 0
        %269 = vmatprep.subr.bf16.mxu0 0
        %270 = vmatpush2.bf16.msra.mxu0 0
        %271 = vmatprep.subr.bf16.mxu0 0
        %272 = vmatpush2.bf16.msra.mxu0 0
        %273 = vmatprep.mubr.bf16.mxu0 0
        %274 = vmatmul.mubr.bf16.gmra.mxu0 %v239
        %v275 = vpop.f32.mrf.mxu0
        %v276 = vadd.f32 0.0, %v275
        %v277 = vpop.f32.mrf.mxu0
        %v278 = vpop.f32.mrf.mxu0
        %v279 = vpop.f32.mrf.mxu0
        %280 = vdwg.mxu0
        %v289 = vunpack.c.l.b16 %v183
        %v290 = vunpack.c.l.b16 %v184
        %v291 = vunpack.c.l.b16 %v185
        %v292 = vunpack.c.l.b16 %v186
        %v293 = vunpack.c.l.b16 %v187
        %v294 = vunpack.c.l.b16 %v188
        %v295 = vunpack.c.l.b16 %v189
        %v296 = vunpack.c.l.b16 %v190
        %v297 = vpack.c.b16 %v290, %v289
        %v298 = vpack.c.b16 %v292, %v291
        %v299 = vpack.c.b16 %v294, %v293
        %v300 = vpack.c.b16 %v296, %v295
        %v306 = vsel %vm237, %v182, 0
        %308 = vmatprep.subr.bf16.mxu0 0
        %309 = vmatpush1.bf16.msra.mxu0 0
        %310 = vmatprep.subr.bf16.mxu0 0
        %311 = vmatpush1.bf16.msra.mxu0 0
        %312 = vmatprep.subr.bf16.mxu0 0
        %313 = vmatpush1.bf16.msra.mxu0 0
        %314 = vmatprep.subr.bf16.mxu0 0
        %315 = vmatpush1.bf16.msra.mxu0 0
        %316 = vmatprep.subr.bf16.mxu0 0
        %317 = vmatpush1.bf16.msra.mxu0 %v300
        %318 = vmatprep.subr.bf16.mxu0 0
        %319 = vmatpush1.bf16.msra.mxu0 %v299
        %320 = vmatprep.subr.bf16.mxu0 0
        %321 = vmatpush1.bf16.msra.mxu0 %v298
        %322 = vmatprep.subr.bf16.mxu0 0
        %323 = vmatpush1.bf16.msra.mxu0 %v297
        %324 = vmatprep.subr.bf16.mxu0 0
        %325 = vmatpush2.bf16.msra.mxu0 0
        %326 = vmatprep.subr.bf16.mxu0 0
        %327 = vmatpush2.bf16.msra.mxu0 0
        %328 = vmatprep.subr.bf16.mxu0 0
        %329 = vmatpush2.bf16.msra.mxu0 0
        %330 = vmatprep.subr.bf16.mxu0 0
        %331 = vmatpush2.bf16.msra.mxu0 0
        %332 = vmatprep.subr.bf16.mxu0 0
        %333 = vmatpush2.bf16.msra.mxu0 0
        %334 = vmatprep.subr.bf16.mxu0 0
        %335 = vmatpush2.bf16.msra.mxu0 0
        %336 = vmatprep.subr.bf16.mxu0 0
        %337 = vmatpush2.bf16.msra.mxu0 0
        %338 = vmatprep.subr.bf16.mxu0 0
        %339 = vmatpush2.bf16.msra.mxu0 0
        %340 = vmatprep.mubr.bf16.mxu0 0
        %341 = vmatmul.mubr.bf16.gmra.mxu0 %v306
        %v342 = vpop.f32.mrf.mxu0
        %v343 = vadd.f32 %v276, %v342
        %v344 = vpop.f32.mrf.mxu0
        %v345 = vpop.f32.mrf.mxu0
        %v346 = vpop.f32.mrf.mxu0
        %347 = vdwg.mxu0
        %v348 = vld [vmem:[%s181] sm:$0xe]
        %s349 = scalar_lea.vmem %s1, 64
        %v350 = vld [vmem:[%s349] sm:$0xf]
        %v351 = vld [vmem:[%s349 + $0x4] sm:$0xf]
        %v352 = vld [vmem:[%s349 + $0x8] sm:$0xf]
        %v353 = vld [vmem:[%s349 + $0xc] sm:$0xf]
        %v354 = vld [vmem:[%s349 + $0x10] sm:$0xf]
        %v355 = vld [vmem:[%s349 + $0x14] sm:$0xf]
        %v356 = vld [vmem:[%s349 + $0x18] sm:$0xf]
        %v357 = vld [vmem:[%s349 + $0x1c] sm:$0xf]
        %v359 = vunpack.c.l.b16 %v348
        %v360 = vpack.c.b16 %v204, %v359
        %v361 = vrot.slane %v360, 1
        %v370 = vunpack.c.l.b16 %v350
        %v371 = vunpack.c.l.b16 %v351
        %v372 = vunpack.c.l.b16 %v352
        %v373 = vunpack.c.l.b16 %v353
        %v374 = vunpack.c.l.b16 %v354
        %v375 = vunpack.c.l.b16 %v355
        %v376 = vunpack.c.l.b16 %v356
        %v377 = vunpack.c.l.b16 %v357
        %v378 = vpack.c.b16 %v371, %v370
        %v379 = vpack.c.b16 %v373, %v372
        %v380 = vpack.c.b16 %v375, %v374
        %v381 = vpack.c.b16 %v377, %v376
        %v387 = vsel %vm237, %v361, 0
        %389 = vmatprep.subr.bf16.mxu0 0
        %390 = vmatpush1.bf16.msra.mxu0 0
        %391 = vmatprep.subr.bf16.mxu0 0
        %392 = vmatpush1.bf16.msra.mxu0 0
        %393 = vmatprep.subr.bf16.mxu0 0
        %394 = vmatpush1.bf16.msra.mxu0 0
        %395 = vmatprep.subr.bf16.mxu0 0
        %396 = vmatpush1.bf16.msra.mxu0 0
        %397 = vmatprep.subr.bf16.mxu0 0
        %398 = vmatpush1.bf16.msra.mxu0 %v381
        %399 = vmatprep.subr.bf16.mxu0 0
        %400 = vmatpush1.bf16.msra.mxu0 %v380
        %401 = vmatprep.subr.bf16.mxu0 0
        %402 = vmatpush1.bf16.msra.mxu0 %v379
        %403 = vmatprep.subr.bf16.mxu0 0
        %404 = vmatpush1.bf16.msra.mxu0 %v378
        %405 = vmatprep.subr.bf16.mxu0 0
        %406 = vmatpush2.bf16.msra.mxu0 0
        %407 = vmatprep.subr.bf16.mxu0 0
        %408 = vmatpush2.bf16.msra.mxu0 0
        %409 = vmatprep.subr.bf16.mxu0 0
        %410 = vmatpush2.bf16.msra.mxu0 0
        %411 = vmatprep.subr.bf16.mxu0 0
        %412 = vmatpush2.bf16.msra.mxu0 0
        %413 = vmatprep.subr.bf16.mxu0 0
        %414 = vmatpush2.bf16.msra.mxu0 0
        %415 = vmatprep.subr.bf16.mxu0 0
        %416 = vmatpush2.bf16.msra.mxu0 0
        %417 = vmatprep.subr.bf16.mxu0 0
        %418 = vmatpush2.bf16.msra.mxu0 0
        %419 = vmatprep.subr.bf16.mxu0 0
        %420 = vmatpush2.bf16.msra.mxu0 0
        %421 = vmatprep.mubr.bf16.mxu0 0
        %422 = vmatmul.mubr.bf16.gmra.mxu0 %v387
        %v423 = vpop.f32.mrf.mxu0
        %v424 = vadd.f32 0.0, %v423
        %v425 = vpop.f32.mrf.mxu0
        %v426 = vpop.f32.mrf.mxu0
        %v427 = vpop.f32.mrf.mxu0
        %428 = vdwg.mxu0
        %v429 = vadd.f32 %v343, %v424
        %s430 = sadd.s32 %s174, 1
        %s431 = smul.u32 %s430, 2
        %s432 = smul.addr %s431, 4
        %s433 = scalar_lea.vmem %s165, %s432
        %v434 = vld [vmem:[%s433] sm:$0xf]
        %s435 = scalar_lea.vmem %s1, 96
        %v436 = vld [vmem:[%s435] sm:$0xf]
        %v437 = vld [vmem:[%s435 + $0x4] sm:$0xf]
        %v438 = vld [vmem:[%s435 + $0x8] sm:$0xf]
        %v439 = vld [vmem:[%s435 + $0xc] sm:$0xf]
        %v440 = vld [vmem:[%s435 + $0x10] sm:$0xf]
        %v441 = vld [vmem:[%s435 + $0x14] sm:$0xf]
        %v442 = vld [vmem:[%s435 + $0x18] sm:$0xf]
        %v443 = vld [vmem:[%s435 + $0x1c] sm:$0xf]
        %v452 = vunpack.c.l.b16 %v436
        %v453 = vunpack.c.l.b16 %v437
        %v454 = vunpack.c.l.b16 %v438
        %v455 = vunpack.c.l.b16 %v439
        %v456 = vunpack.c.l.b16 %v440
        %v457 = vunpack.c.l.b16 %v441
        %v458 = vunpack.c.l.b16 %v442
        %v459 = vunpack.c.l.b16 %v443
        %v460 = vpack.c.b16 %v453, %v452
        %v461 = vpack.c.b16 %v455, %v454
        %v462 = vpack.c.b16 %v457, %v456
        %v463 = vpack.c.b16 %v459, %v458
        %v469 = vsel %vm237, %v434, 0
        %471 = vmatprep.subr.bf16.mxu0 0
        %472 = vmatpush1.bf16.msra.mxu0 0
        %473 = vmatprep.subr.bf16.mxu0 0
        %474 = vmatpush1.bf16.msra.mxu0 0
        %475 = vmatprep.subr.bf16.mxu0 0
        %476 = vmatpush1.bf16.msra.mxu0 0
        %477 = vmatprep.subr.bf16.mxu0 0
        %478 = vmatpush1.bf16.msra.mxu0 0
        %479 = vmatprep.subr.bf16.mxu0 0
        %480 = vmatpush1.bf16.msra.mxu0 %v463
        %481 = vmatprep.subr.bf16.mxu0 0
        %482 = vmatpush1.bf16.msra.mxu0 %v462
        %483 = vmatprep.subr.bf16.mxu0 0
        %484 = vmatpush1.bf16.msra.mxu0 %v461
        %485 = vmatprep.subr.bf16.mxu0 0
        %486 = vmatpush1.bf16.msra.mxu0 %v460
        %487 = vmatprep.subr.bf16.mxu0 0
        %488 = vmatpush2.bf16.msra.mxu0 0
        %489 = vmatprep.subr.bf16.mxu0 0
        %490 = vmatpush2.bf16.msra.mxu0 0
        %491 = vmatprep.subr.bf16.mxu0 0
        %492 = vmatpush2.bf16.msra.mxu0 0
        %493 = vmatprep.subr.bf16.mxu0 0
        %494 = vmatpush2.bf16.msra.mxu0 0
        %495 = vmatprep.subr.bf16.mxu0 0
        %496 = vmatpush2.bf16.msra.mxu0 0
        %497 = vmatprep.subr.bf16.mxu0 0
        %498 = vmatpush2.bf16.msra.mxu0 0
        %499 = vmatprep.subr.bf16.mxu0 0
        %500 = vmatpush2.bf16.msra.mxu0 0
        %501 = vmatprep.subr.bf16.mxu0 0
        %502 = vmatpush2.bf16.msra.mxu0 0
        %503 = vmatprep.mubr.bf16.mxu0 0
        %504 = vmatmul.mubr.bf16.gmra.mxu0 %v469
        %v505 = vpop.f32.mrf.mxu0
        %v506 = vadd.f32 0.0, %v505
        %v507 = vpop.f32.mrf.mxu0
        %v508 = vpop.f32.mrf.mxu0
        %v509 = vpop.f32.mrf.mxu0
        %510 = vdwg.mxu0
        %v511 = vadd.f32 %v429, %v506
        %v512 = vld [vmem:[%s433] sm:$0xf]
        %v513 = vld [vmem:[%s433 + $0x4] sm:$0x1]
        %s514 = scalar_lea.vmem %s1, 128
        %v515 = vld [vmem:[%s514] sm:$0xf]
        %v516 = vld [vmem:[%s514 + $0x4] sm:$0xf]
        %v517 = vld [vmem:[%s514 + $0x8] sm:$0xf]
        %v518 = vld [vmem:[%s514 + $0xc] sm:$0xf]
        %v519 = vld [vmem:[%s514 + $0x10] sm:$0xf]
        %v520 = vld [vmem:[%s514 + $0x14] sm:$0xf]
        %v521 = vld [vmem:[%s514 + $0x18] sm:$0xf]
        %v522 = vld [vmem:[%s514 + $0x1c] sm:$0xf]
        %v525 = vunpack.c.l.b16 %v512
        %v526 = vunpack.c.l.b16 %v513
        %v527 = vpack.c.b16 %v526, %v525
        %v529 = vshrl.u32 %v527, 16
        %v531 = vshll.u32 %v527, 16
        %v533 = vrot.slane %v531, 1
        %v534 = vor.u32 %v529, %v533
        %v543 = vunpack.c.l.b16 %v515
        %v544 = vunpack.c.l.b16 %v516
        %v545 = vunpack.c.l.b16 %v517
        %v546 = vunpack.c.l.b16 %v518
        %v547 = vunpack.c.l.b16 %v519
        %v548 = vunpack.c.l.b16 %v520
        %v549 = vunpack.c.l.b16 %v521
        %v550 = vunpack.c.l.b16 %v522
        %v551 = vpack.c.b16 %v544, %v543
        %v552 = vpack.c.b16 %v546, %v545
        %v553 = vpack.c.b16 %v548, %v547
        %v554 = vpack.c.b16 %v550, %v549
        %v560 = vsel %vm237, %v534, 0
        %562 = vmatprep.subr.bf16.mxu0 0
        %563 = vmatpush1.bf16.msra.mxu0 0
        %564 = vmatprep.subr.bf16.mxu0 0
        %565 = vmatpush1.bf16.msra.mxu0 0
        %566 = vmatprep.subr.bf16.mxu0 0
        %567 = vmatpush1.bf16.msra.mxu0 0
        %568 = vmatprep.subr.bf16.mxu0 0
        %569 = vmatpush1.bf16.msra.mxu0 0
        %570 = vmatprep.subr.bf16.mxu0 0
        %571 = vmatpush1.bf16.msra.mxu0 %v554
        %572 = vmatprep.subr.bf16.mxu0 0
        %573 = vmatpush1.bf16.msra.mxu0 %v553
        %574 = vmatprep.subr.bf16.mxu0 0
        %575 = vmatpush1.bf16.msra.mxu0 %v552
        %576 = vmatprep.subr.bf16.mxu0 0
        %577 = vmatpush1.bf16.msra.mxu0 %v551
        %578 = vmatprep.subr.bf16.mxu0 0
        %579 = vmatpush2.bf16.msra.mxu0 0
        %580 = vmatprep.subr.bf16.mxu0 0
        %581 = vmatpush2.bf16.msra.mxu0 0
        %582 = vmatprep.subr.bf16.mxu0 0
        %583 = vmatpush2.bf16.msra.mxu0 0
        %584 = vmatprep.subr.bf16.mxu0 0
        %585 = vmatpush2.bf16.msra.mxu0 0
        %586 = vmatprep.subr.bf16.mxu0 0
        %587 = vmatpush2.bf16.msra.mxu0 0
        %588 = vmatprep.subr.bf16.mxu0 0
        %589 = vmatpush2.bf16.msra.mxu0 0
        %590 = vmatprep.subr.bf16.mxu0 0
        %591 = vmatpush2.bf16.msra.mxu0 0
        %592 = vmatprep.subr.bf16.mxu0 0
        %593 = vmatpush2.bf16.msra.mxu0 0
        %594 = vmatprep.mubr.bf16.mxu0 0
        %595 = vmatmul.mubr.bf16.gmra.mxu0 %v560
        %v596 = vpop.f32.mrf.mxu0
        %v597 = vadd.f32 0.0, %v596
        %v598 = vpop.f32.mrf.mxu0
        %v599 = vpop.f32.mrf.mxu0
        %v600 = vpop.f32.mrf.mxu0
        %601 = vdwg.mxu0
        %v602 = vadd.f32 %v511, %v597
        %v603 = vld [vmem:[%s433] sm:$0xe]
        %s604 = scalar_lea.vmem %s1, 160
        %v605 = vld [vmem:[%s604] sm:$0xf]
        %v606 = vld [vmem:[%s604 + $0x4] sm:$0xf]
        %v607 = vld [vmem:[%s604 + $0x8] sm:$0xf]
        %v608 = vld [vmem:[%s604 + $0xc] sm:$0xf]
        %v609 = vld [vmem:[%s604 + $0x10] sm:$0xf]
        %v610 = vld [vmem:[%s604 + $0x14] sm:$0xf]
        %v611 = vld [vmem:[%s604 + $0x18] sm:$0xf]
        %v612 = vld [vmem:[%s604 + $0x1c] sm:$0xf]
        %v614 = vunpack.c.l.b16 %v603
        %v615 = vpack.c.b16 %v526, %v614
        %v616 = vrot.slane %v615, 1
        %v625 = vunpack.c.l.b16 %v605
        %v626 = vunpack.c.l.b16 %v606
        %v627 = vunpack.c.l.b16 %v607
        %v628 = vunpack.c.l.b16 %v608
        %v629 = vunpack.c.l.b16 %v609
        %v630 = vunpack.c.l.b16 %v610
        %v631 = vunpack.c.l.b16 %v611
        %v632 = vunpack.c.l.b16 %v612
        %v633 = vpack.c.b16 %v626, %v625
        %v634 = vpack.c.b16 %v628, %v627
        %v635 = vpack.c.b16 %v630, %v629
        %v636 = vpack.c.b16 %v632, %v631
        %v642 = vsel %vm237, %v616, 0
        %644 = vmatprep.subr.bf16.mxu0 0
        %645 = vmatpush1.bf16.msra.mxu0 0
        %646 = vmatprep.subr.bf16.mxu0 0
        %647 = vmatpush1.bf16.msra.mxu0 0
        %648 = vmatprep.subr.bf16.mxu0 0
        %649 = vmatpush1.bf16.msra.mxu0 0
        %650 = vmatprep.subr.bf16.mxu0 0
        %651 = vmatpush1.bf16.msra.mxu0 0
        %652 = vmatprep.subr.bf16.mxu0 0
        %653 = vmatpush1.bf16.msra.mxu0 %v636
        %654 = vmatprep.subr.bf16.mxu0 0
        %655 = vmatpush1.bf16.msra.mxu0 %v635
        %656 = vmatprep.subr.bf16.mxu0 0
        %657 = vmatpush1.bf16.msra.mxu0 %v634
        %658 = vmatprep.subr.bf16.mxu0 0
        %659 = vmatpush1.bf16.msra.mxu0 %v633
        %660 = vmatprep.subr.bf16.mxu0 0
        %661 = vmatpush2.bf16.msra.mxu0 0
        %662 = vmatprep.subr.bf16.mxu0 0
        %663 = vmatpush2.bf16.msra.mxu0 0
        %664 = vmatprep.subr.bf16.mxu0 0
        %665 = vmatpush2.bf16.msra.mxu0 0
        %666 = vmatprep.subr.bf16.mxu0 0
        %667 = vmatpush2.bf16.msra.mxu0 0
        %668 = vmatprep.subr.bf16.mxu0 0
        %669 = vmatpush2.bf16.msra.mxu0 0
        %670 = vmatprep.subr.bf16.mxu0 0
        %671 = vmatpush2.bf16.msra.mxu0 0
        %672 = vmatprep.subr.bf16.mxu0 0
        %673 = vmatpush2.bf16.msra.mxu0 0
        %674 = vmatprep.subr.bf16.mxu0 0
        %675 = vmatpush2.bf16.msra.mxu0 0
        %676 = vmatprep.mubr.bf16.mxu0 0
        %677 = vmatmul.mubr.bf16.gmra.mxu0 %v642
        %v678 = vpop.f32.mrf.mxu0
        %v679 = vadd.f32 0.0, %v678
        %v680 = vpop.f32.mrf.mxu0
        %v681 = vpop.f32.mrf.mxu0
        %v682 = vpop.f32.mrf.mxu0
        %683 = vdwg.mxu0
        %v684 = vadd.f32 %v602, %v679
        %s685 = sadd.s32 %s174, 2
        %s686 = smul.u32 %s685, 2
        %s687 = smul.addr %s686, 4
        %s688 = scalar_lea.vmem %s165, %s687
        %v689 = vld [vmem:[%s688] sm:$0xf]
        %s690 = scalar_lea.vmem %s1, 192
        %v691 = vld [vmem:[%s690] sm:$0xf]
        %v692 = vld [vmem:[%s690 + $0x4] sm:$0xf]
        %v693 = vld [vmem:[%s690 + $0x8] sm:$0xf]
        %v694 = vld [vmem:[%s690 + $0xc] sm:$0xf]
        %v695 = vld [vmem:[%s690 + $0x10] sm:$0xf]
        %v696 = vld [vmem:[%s690 + $0x14] sm:$0xf]
        %v697 = vld [vmem:[%s690 + $0x18] sm:$0xf]
        %v698 = vld [vmem:[%s690 + $0x1c] sm:$0xf]
        %v707 = vunpack.c.l.b16 %v691
        %v708 = vunpack.c.l.b16 %v692
        %v709 = vunpack.c.l.b16 %v693
        %v710 = vunpack.c.l.b16 %v694
        %v711 = vunpack.c.l.b16 %v695
        %v712 = vunpack.c.l.b16 %v696
        %v713 = vunpack.c.l.b16 %v697
        %v714 = vunpack.c.l.b16 %v698
        %v715 = vpack.c.b16 %v708, %v707
        %v716 = vpack.c.b16 %v710, %v709
        %v717 = vpack.c.b16 %v712, %v711
        %v718 = vpack.c.b16 %v714, %v713
        %v724 = vsel %vm237, %v689, 0
        %726 = vmatprep.subr.bf16.mxu0 0
        %727 = vmatpush1.bf16.msra.mxu0 0
        %728 = vmatprep.subr.bf16.mxu0 0
        %729 = vmatpush1.bf16.msra.mxu0 0
        %730 = vmatprep.subr.bf16.mxu0 0
        %731 = vmatpush1.bf16.msra.mxu0 0
        %732 = vmatprep.subr.bf16.mxu0 0
        %733 = vmatpush1.bf16.msra.mxu0 0
        %734 = vmatprep.subr.bf16.mxu0 0
        %735 = vmatpush1.bf16.msra.mxu0 %v718
        %736 = vmatprep.subr.bf16.mxu0 0
        %737 = vmatpush1.bf16.msra.mxu0 %v717
        %738 = vmatprep.subr.bf16.mxu0 0
        %739 = vmatpush1.bf16.msra.mxu0 %v716
        %740 = vmatprep.subr.bf16.mxu0 0
        %741 = vmatpush1.bf16.msra.mxu0 %v715
        %742 = vmatprep.subr.bf16.mxu0 0
        %743 = vmatpush2.bf16.msra.mxu0 0
        %744 = vmatprep.subr.bf16.mxu0 0
        %745 = vmatpush2.bf16.msra.mxu0 0
        %746 = vmatprep.subr.bf16.mxu0 0
        %747 = vmatpush2.bf16.msra.mxu0 0
        %748 = vmatprep.subr.bf16.mxu0 0
        %749 = vmatpush2.bf16.msra.mxu0 0
        %750 = vmatprep.subr.bf16.mxu0 0
        %751 = vmatpush2.bf16.msra.mxu0 0
        %752 = vmatprep.subr.bf16.mxu0 0
        %753 = vmatpush2.bf16.msra.mxu0 0
        %754 = vmatprep.subr.bf16.mxu0 0
        %755 = vmatpush2.bf16.msra.mxu0 0
        %756 = vmatprep.subr.bf16.mxu0 0
        %757 = vmatpush2.bf16.msra.mxu0 0
        %758 = vmatprep.mubr.bf16.mxu0 0
        %759 = vmatmul.mubr.bf16.gmra.mxu0 %v724
        %v760 = vpop.f32.mrf.mxu0
        %v761 = vadd.f32 0.0, %v760
        %v762 = vpop.f32.mrf.mxu0
        %v763 = vpop.f32.mrf.mxu0
        %v764 = vpop.f32.mrf.mxu0
        %765 = vdwg.mxu0
        %v766 = vadd.f32 %v684, %v761
        %v767 = vld [vmem:[%s688] sm:$0xf]
        %v768 = vld [vmem:[%s688 + $0x4] sm:$0x1]
        %s769 = scalar_lea.vmem %s1, 224
        %v770 = vld [vmem:[%s769] sm:$0xf]
        %v771 = vld [vmem:[%s769 + $0x4] sm:$0xf]
        %v772 = vld [vmem:[%s769 + $0x8] sm:$0xf]
        %v773 = vld [vmem:[%s769 + $0xc] sm:$0xf]
        %v774 = vld [vmem:[%s769 + $0x10] sm:$0xf]
        %v775 = vld [vmem:[%s769 + $0x14] sm:$0xf]
        %v776 = vld [vmem:[%s769 + $0x18] sm:$0xf]
        %v777 = vld [vmem:[%s769 + $0x1c] sm:$0xf]
        %v780 = vunpack.c.l.b16 %v767
        %v781 = vunpack.c.l.b16 %v768
        %v782 = vpack.c.b16 %v781, %v780
        %v784 = vshrl.u32 %v782, 16
        %v786 = vshll.u32 %v782, 16
        %v788 = vrot.slane %v786, 1
        %v789 = vor.u32 %v784, %v788
        %v798 = vunpack.c.l.b16 %v770
        %v799 = vunpack.c.l.b16 %v771
        %v800 = vunpack.c.l.b16 %v772
        %v801 = vunpack.c.l.b16 %v773
        %v802 = vunpack.c.l.b16 %v774
        %v803 = vunpack.c.l.b16 %v775
        %v804 = vunpack.c.l.b16 %v776
        %v805 = vunpack.c.l.b16 %v777
        %v806 = vpack.c.b16 %v799, %v798
        %v807 = vpack.c.b16 %v801, %v800
        %v808 = vpack.c.b16 %v803, %v802
        %v809 = vpack.c.b16 %v805, %v804
        %v815 = vsel %vm237, %v789, 0
        %817 = vmatprep.subr.bf16.mxu0 0
        %818 = vmatpush1.bf16.msra.mxu0 0
        %819 = vmatprep.subr.bf16.mxu0 0
        %820 = vmatpush1.bf16.msra.mxu0 0
        %821 = vmatprep.subr.bf16.mxu0 0
        %822 = vmatpush1.bf16.msra.mxu0 0
        %823 = vmatprep.subr.bf16.mxu0 0
        %824 = vmatpush1.bf16.msra.mxu0 0
        %825 = vmatprep.subr.bf16.mxu0 0
        %826 = vmatpush1.bf16.msra.mxu0 %v809
        %827 = vmatprep.subr.bf16.mxu0 0
        %828 = vmatpush1.bf16.msra.mxu0 %v808
        %829 = vmatprep.subr.bf16.mxu0 0
        %830 = vmatpush1.bf16.msra.mxu0 %v807
        %831 = vmatprep.subr.bf16.mxu0 0
        %832 = vmatpush1.bf16.msra.mxu0 %v806
        %833 = vmatprep.subr.bf16.mxu0 0
        %834 = vmatpush2.bf16.msra.mxu0 0
        %835 = vmatprep.subr.bf16.mxu0 0
        %836 = vmatpush2.bf16.msra.mxu0 0
        %837 = vmatprep.subr.bf16.mxu0 0
        %838 = vmatpush2.bf16.msra.mxu0 0
        %839 = vmatprep.subr.bf16.mxu0 0
        %840 = vmatpush2.bf16.msra.mxu0 0
        %841 = vmatprep.subr.bf16.mxu0 0
        %842 = vmatpush2.bf16.msra.mxu0 0
        %843 = vmatprep.subr.bf16.mxu0 0
        %844 = vmatpush2.bf16.msra.mxu0 0
        %845 = vmatprep.subr.bf16.mxu0 0
        %846 = vmatpush2.bf16.msra.mxu0 0
        %847 = vmatprep.subr.bf16.mxu0 0
        %848 = vmatpush2.bf16.msra.mxu0 0
        %849 = vmatprep.mubr.bf16.mxu0 0
        %850 = vmatmul.mubr.bf16.gmra.mxu0 %v815
        %v851 = vpop.f32.mrf.mxu0
        %v852 = vadd.f32 0.0, %v851
        %v853 = vpop.f32.mrf.mxu0
        %v854 = vpop.f32.mrf.mxu0
        %v855 = vpop.f32.mrf.mxu0
        %856 = vdwg.mxu0
        %v857 = vadd.f32 %v766, %v852
        %v858 = vld [vmem:[%s688] sm:$0xe]
        %s859 = scalar_lea.vmem %s1, 256
        %v860 = vld [vmem:[%s859] sm:$0xf]
        %v861 = vld [vmem:[%s859 + $0x4] sm:$0xf]
        %v862 = vld [vmem:[%s859 + $0x8] sm:$0xf]
        %v863 = vld [vmem:[%s859 + $0xc] sm:$0xf]
        %v864 = vld [vmem:[%s859 + $0x10] sm:$0xf]
        %v865 = vld [vmem:[%s859 + $0x14] sm:$0xf]
        %v866 = vld [vmem:[%s859 + $0x18] sm:$0xf]
        %v867 = vld [vmem:[%s859 + $0x1c] sm:$0xf]
        %v869 = vunpack.c.l.b16 %v858
        %v870 = vpack.c.b16 %v781, %v869
        %v871 = vrot.slane %v870, 1
        %v880 = vunpack.c.l.b16 %v860
        %v881 = vunpack.c.l.b16 %v861
        %v882 = vunpack.c.l.b16 %v862
        %v883 = vunpack.c.l.b16 %v863
        %v884 = vunpack.c.l.b16 %v864
        %v885 = vunpack.c.l.b16 %v865
        %v886 = vunpack.c.l.b16 %v866
        %v887 = vunpack.c.l.b16 %v867
        %v888 = vpack.c.b16 %v881, %v880
        %v889 = vpack.c.b16 %v883, %v882
        %v890 = vpack.c.b16 %v885, %v884
        %v891 = vpack.c.b16 %v887, %v886
        %v897 = vsel %vm237, %v871, 0
        %899 = vmatprep.subr.bf16.mxu0 0
        %900 = vmatpush1.bf16.msra.mxu0 0
        %901 = vmatprep.subr.bf16.mxu0 0
        %902 = vmatpush1.bf16.msra.mxu0 0
        %903 = vmatprep.subr.bf16.mxu0 0
        %904 = vmatpush1.bf16.msra.mxu0 0
        %905 = vmatprep.subr.bf16.mxu0 0
        %906 = vmatpush1.bf16.msra.mxu0 0
        %907 = vmatprep.subr.bf16.mxu0 0
        %908 = vmatpush1.bf16.msra.mxu0 %v891
        %909 = vmatprep.subr.bf16.mxu0 0
        %910 = vmatpush1.bf16.msra.mxu0 %v890
        %911 = vmatprep.subr.bf16.mxu0 0
        %912 = vmatpush1.bf16.msra.mxu0 %v889
        %913 = vmatprep.subr.bf16.mxu0 0
        %914 = vmatpush1.bf16.msra.mxu0 %v888
        %915 = vmatprep.subr.bf16.mxu0 0
        %916 = vmatpush2.bf16.msra.mxu0 0
        %917 = vmatprep.subr.bf16.mxu0 0
        %918 = vmatpush2.bf16.msra.mxu0 0
        %919 = vmatprep.subr.bf16.mxu0 0
        %920 = vmatpush2.bf16.msra.mxu0 0
        %921 = vmatprep.subr.bf16.mxu0 0
        %922 = vmatpush2.bf16.msra.mxu0 0
        %923 = vmatprep.subr.bf16.mxu0 0
        %924 = vmatpush2.bf16.msra.mxu0 0
        %925 = vmatprep.subr.bf16.mxu0 0
        %926 = vmatpush2.bf16.msra.mxu0 0
        %927 = vmatprep.subr.bf16.mxu0 0
        %928 = vmatpush2.bf16.msra.mxu0 0
        %929 = vmatprep.subr.bf16.mxu0 0
        %930 = vmatpush2.bf16.msra.mxu0 0
        %931 = vmatprep.mubr.bf16.mxu0 0
        %932 = vmatmul.mubr.bf16.gmra.mxu0 %v897
        %v933 = vpop.f32.mrf.mxu0
        %v934 = vadd.f32 0.0, %v933
        %v935 = vpop.f32.mrf.mxu0
        %v936 = vpop.f32.mrf.mxu0
        %v937 = vpop.f32.mrf.mxu0
        %938 = vdwg.mxu0
        %v939 = vadd.f32 %v857, %v934
        %v941 = vlaneseq
        %v942 = vshrl.u32 %v941, 7
        %v943 = vsub.s32 0, %v942
        %v944 = vrot.slane %v172, %v943
        %v946 = vadd.f32 %v939, %v944
        %v947 = vmax.f32 %v946, 0.0
        %v948 = vpack.c.bf16 %v947, %v947
        %s949 = smul.addr %s174, 4
        %s950 = scalar_lea.vmem %s170, %s949
        %vm951 = vcmask 257024
        %952 = vst.msk [vmem:[%s950] sm:$0xf] %vm951, %v948
      $region37: #{net_t_forward.5} parent=31 // loop_footer
        %s178 = sadd.s32 1, %s174
      $region38: #{net_t_forward.5} parent=31 // loop_footer_branch
        %173 = sbr.rel target = $region34
      $region39: #{net_t_forward.5} parent=31 // loop_exit
        _
      %p953 = scmp.lt.s32.totalorder %s14, 1
      %s954 = scalar_select %p953, %s14, 1
      %s955 = smul.addr %s954, 8
      %s956 = smul.addr %s955, 4
      %s957 = scalar_lea.vmem %s3, %s956
      // Predicated region
      $region40: #{net_t_forward.5} parent=31 // pred_check
        %p958 = pneg %p100
      $region41: #{net_t_forward.5} parent=31 // pred_check_branch
        %960 = sbr.rel (%p958) target = $region43
      $region42: #{net_t_forward.5} parent=31 // pred_region
        _
      $region43: #{net_t_forward.5} parent=31 // pred_fallthru
        _
    $region32: #{net_t_forward.5} parent=5 // pred_fallthru
      _
    %p961 = scmp.le.s32.totalorder 2, %s9
    // Predicated region
    $region44: #{net_t_forward.5} parent=5 // pred_check
      %p962 = pneg %p961
    $region45: #{net_t_forward.5} parent=5 // pred_check_branch
      %964 = sbr.rel (%p962) target = $region47
    $region46: #{net_t_forward.5} parent=5 // pred_region
      %s965 = ssub.s32 %s9, 2
      // Predicated region
      $region48: #{net_t_forward.5} parent=46 // pred_check
        %p966 = pneg %p106
      $region49: #{net_t_forward.5} parent=46 // pred_check_branch
        %968 = sbr.rel (%p966) target = $region51
      $region50: #{net_t_forward.5} parent=46 // pred_region
        %p969 = scmp.lt.s32.totalorder %s15, 1
        %s970 = scalar_select %p969, %s15, 1
        %s971 = smul.addr %s970, 8
        %s972 = smul.addr %s971, 4
        %s973 = scalar_lea.vmem %s3, %s972
      $region51: #{net_t_forward.5} parent=46 // pred_fallthru
        _
    $region47: #{net_t_forward.5} parent=5 // pred_fallthru
      _
  $region6: #{net_t_forward.5} parent=0 // loop_footer
    %s13 = sadd.s32 1, %s9
  $region7: #{net_t_forward.5} parent=0 // loop_footer_branch
    %8 = sbr.rel target = $region3
  $region8: #{net_t_forward.5} parent=0 // loop_exit
    _

</llo_original>
